<compile_context>
chip_gen: v7x
topology: tpu7x:2x2x1
jax: 0.10.0
libtpu: 0.0.40
codegen_flags: <defaults>
</compile_context>

<pallas_src>
import jax
import jax.numpy as jnp
from jax.experimental import pallas as pl
from jax.experimental.pallas import tpu as pltpu


# TODO(synk): nn.GELU() uses exact erf; the tanh-form GELU below differs by
# ~1e-3 max abs (well inside the test tolerance) and keeps VALU work low on
# v7x where the GELU, not HBM/MXU, is the binding unit.
def _gelu_tanh(x):
    # 0.5 * x * (1 + tanh(sqrt(2/pi) * (x + 0.044715 x^3)))
    inner = 0.7978845608028654 * x * (1.0 + 0.044715 * x * x)
    return 0.5 * x * (1.0 + jnp.tanh(inner))


# ---------------------------------------------------------------------------
# Fused MLP kernel: one (batch, voxel-tile) block per grid step.
#   x_ref : (C,  TN)   w1_ref : (Hd, C)   b1_ref : (Hd, 1)
#   o_ref : (Co, TN)   w2_ref : (Co, Hd)  b2_ref : (Co, 1)
# ---------------------------------------------------------------------------
def _mlp_kernel(x_ref, w1_ref, b1_ref, w2_ref, b2_ref, o_ref):
    x = x_ref[...]                                                    # (C, TN)
    h = jnp.dot(w1_ref[...], x, preferred_element_type=jnp.float32)  # (Hd, TN)
    h = _gelu_tanh(h + b1_ref[...])
    y = jnp.dot(w2_ref[...], h, preferred_element_type=jnp.float32)  # (Co, TN)
    o_ref[...] = (y + b2_ref[...]).astype(o_ref.dtype)


def _round_up(x, m):
    return (x + m - 1) // m * m


def mlp_forward(x, w1, b1, w2, b2, *, tn=8192):
    """Forward pass of the MLP module.

    x  : (B, C, T, H, W)  NCDHW, float32
    w1 : (hidden, C), b1 : (hidden,)   -- fc1 (1x1x1 Conv3d)
    w2 : (out,   hidden), b2 : (out,)  -- fc2 (1x1x1 Conv3d)
    returns (B, out, T, H, W)
    """
    B, C, T, H, W = x.shape
    Hd = w1.shape[0]
    Co = w2.shape[0]
    THW = T * H * W

    # Free (no data movement) trailing-dim merge: native NCDHW layout is kept.
    x3d = x.reshape(B, C, THW)

    # Lane tile (multiple of 128), clamped to the per-sample voxel count.
    tn = min(tn, _round_up(THW, 128))
    grid = (B, pl.cdiv(THW, tn))

    out3d = pl.pallas_call(
        _mlp_kernel,
        grid=grid,
        in_specs=[
            pl.BlockSpec((pl.Squeezed(), C, tn), lambda b, i: (b, 0, i)),  # x
            pl.BlockSpec((Hd, C), lambda b, i: (0, 0)),                    # W1
            pl.BlockSpec((Hd, 1), lambda b, i: (0, 0)),                    # b1
            pl.BlockSpec((Co, Hd), lambda b, i: (0, 0)),                   # W2
            pl.BlockSpec((Co, 1), lambda b, i: (0, 0)),                    # b2
        ],
        out_specs=pl.BlockSpec((pl.Squeezed(), Co, tn), lambda b, i: (b, 0, i)),
        out_shape=jax.ShapeDtypeStruct((B, Co, THW), jnp.float32),
        compiler_params=pltpu.CompilerParams(
            dimension_semantics=("parallel", "parallel"),
            vmem_limit_bytes=32 * 1024 * 1024,
        ),
    )(x3d, w1, b1.reshape(Hd, 1), w2, b2.reshape(Co, 1))

    # Free reshape back to (B, Co, T, H, W).
    return out3d.reshape(B, Co, T, H, W)


if __name__ == "__main__":
    # Small shapes consistent with the module: MLP(dim=32, hidden_dim=64)
    # applied to a (B, C, T, H, W) video-like tensor.
    B, C, T, H, W = 2, 32, 4, 16, 16
    hidden = 64

    key = jax.random.PRNGKey(0)
    kx, k1, k2, k3, k4 = jax.random.split(key, 5)
    x = jax.random.normal(kx, (B, C, T, H, W), jnp.float32)
    w1 = jax.random.normal(k1, (hidden, C), jnp.float32) * 0.1
    b1 = jax.random.normal(k2, (hidden,), jnp.float32) * 0.1
    w2 = jax.random.normal(k3, (C, hidden), jnp.float32) * 0.1
    b2 = jax.random.normal(k4, (C,), jnp.float32) * 0.1

    out = jax.block_until_ready(mlp_forward(x, w1, b1, w2, b2))
    assert out.shape == (B, C, T, H, W)
    assert bool(jnp.all(jnp.isfinite(out)))

    # Pure-JAX reference: 1x1x1 Conv3d == channelwise linear, exact-erf GELU.
    xr = jnp.transpose(x, (0, 2, 3, 4, 1)).reshape(-1, C)
    href = jax.nn.gelu(
        jnp.dot(xr, w1.T, precision=jax.lax.Precision.HIGHEST) + b1,
        approximate=False)
    yref = jnp.dot(href, w2.T, precision=jax.lax.Precision.HIGHEST) + b2
    yref = jnp.transpose(yref.reshape(B, T, H, W, C), (0, 4, 1, 2, 3))
    err = float(jnp.max(jnp.abs(out - yref)))
    assert err < 3e-2, f"max abs error vs reference: {err}"

    print("KERNEL_OK")
</pallas_src>

<mosaic_0001>
module attributes {stable_mosaic.version = 11 : i64} {
  func.func @_mlp_kernel(%arg0: i32, %arg1: i32, %arg2: memref<1x32x1024xf32, #tpu.memory_space<vmem>>, %arg3: memref<64x32xf32, #tpu.memory_space<vmem>>, %arg4: memref<64x1xf32, #tpu.memory_space<vmem>>, %arg5: memref<32x64xf32, #tpu.memory_space<vmem>>, %arg6: memref<32x1xf32, #tpu.memory_space<vmem>>, %arg7: memref<1x32x1024xf32, #tpu.memory_space<vmem>>) attributes {dimension_semantics = [#tpu.dimension_semantics<parallel>, #tpu.dimension_semantics<parallel>], iteration_bounds = array<i64: 2, 1>, scalar_prefetch = 0 : i64, scratch_operands = 0 : i64, tpu.core_type = #tpu.core_type<tc>, window_params = [{transform_indices = @transform_0, window_bounds = array<i64: 1, 32, 1024>}, {pipeline_mode = #tpu.pipeline_mode<synchronous>, transform_indices = @transform_1, window_bounds = array<i64: 64, 32>}, {pipeline_mode = #tpu.pipeline_mode<synchronous>, transform_indices = @transform_2, window_bounds = array<i64: 64, 1>}, {pipeline_mode = #tpu.pipeline_mode<synchronous>, transform_indices = @transform_3, window_bounds = array<i64: 32, 64>}, {pipeline_mode = #tpu.pipeline_mode<synchronous>, transform_indices = @transform_4, window_bounds = array<i64: 32, 1>}, {transform_indices = @transform_5, window_bounds = array<i64: 1, 32, 1024>}]} {
    %c0 = arith.constant 0 : index
    %c0_0 = arith.constant 0 : index
    %c0_1 = arith.constant 0 : index
    %0 = vector.load %arg2[%c0, %c0_0, %c0_1] : memref<1x32x1024xf32, #tpu.memory_space<vmem>>, vector<1x32x1024xf32>
    %1 = vector.shape_cast %0 : vector<1x32x1024xf32> to vector<32x1024xf32>
    %c0_2 = arith.constant 0 : index
    %c0_3 = arith.constant 0 : index
    %2 = vector.load %arg3[%c0_2, %c0_3] : memref<64x32xf32, #tpu.memory_space<vmem>>, vector<64x32xf32>
    %cst = arith.constant dense<0.000000e+00> : vector<64x1024xf32>
    %3 = tpu.matmul %2, %1, %cst {dimension_numbers = #tpu.dot_dimension_numbers<[1], [0], [0], [1], [0, 0, 1, 1], [], []>} : vector<64x32xf32>, vector<32x1024xf32>, vector<64x1024xf32> -> vector<64x1024xf32>
    %c0_4 = arith.constant 0 : index
    %c0_5 = arith.constant 0 : index
    %4 = vector.load %arg4[%c0_4, %c0_5] : memref<64x1xf32, #tpu.memory_space<vmem>>, vector<64x1xf32>
    %5 = vector.broadcast %4 : vector<64x1xf32> to vector<64x1024xf32>
    %6 = arith.addf %3, %5 : vector<64x1024xf32>
    %cst_6 = arith.constant 0.797884583 : f32
    %7 = vector.broadcast %cst_6 : f32 to vector<64x1024xf32>
    %8 = arith.mulf %7, %6 : vector<64x1024xf32>
    %cst_7 = arith.constant 4.471500e-02 : f32
    %9 = vector.broadcast %cst_7 : f32 to vector<64x1024xf32>
    %10 = arith.mulf %9, %6 : vector<64x1024xf32>
    %11 = arith.mulf %10, %6 : vector<64x1024xf32>
    %cst_8 = arith.constant 1.000000e+00 : f32
    %12 = vector.broadcast %cst_8 : f32 to vector<64x1024xf32>
    %13 = arith.addf %12, %11 : vector<64x1024xf32>
    %14 = arith.mulf %8, %13 : vector<64x1024xf32>
    %cst_9 = arith.constant 5.000000e-01 : f32
    %15 = vector.broadcast %cst_9 : f32 to vector<64x1024xf32>
    %16 = arith.mulf %15, %6 : vector<64x1024xf32>
    %17 = math.tanh %14 : vector<64x1024xf32>
    %cst_10 = arith.constant 1.000000e+00 : f32
    %18 = vector.broadcast %cst_10 : f32 to vector<64x1024xf32>
    %19 = arith.addf %18, %17 : vector<64x1024xf32>
    %20 = arith.mulf %16, %19 : vector<64x1024xf32>
    %c0_11 = arith.constant 0 : index
    %c0_12 = arith.constant 0 : index
    %21 = vector.load %arg5[%c0_11, %c0_12] : memref<32x64xf32, #tpu.memory_space<vmem>>, vector<32x64xf32>
    %cst_13 = arith.constant dense<0.000000e+00> : vector<32x1024xf32>
    %22 = tpu.matmul %21, %20, %cst_13 {dimension_numbers = #tpu.dot_dimension_numbers<[1], [0], [0], [1], [0, 0, 1, 1], [], []>} : vector<32x64xf32>, vector<64x1024xf32>, vector<32x1024xf32> -> vector<32x1024xf32>
    %c0_14 = arith.constant 0 : index
    %c0_15 = arith.constant 0 : index
    %23 = vector.load %arg6[%c0_14, %c0_15] : memref<32x1xf32, #tpu.memory_space<vmem>>, vector<32x1xf32>
    %24 = vector.broadcast %23 : vector<32x1xf32> to vector<32x1024xf32>
    %25 = arith.addf %22, %24 : vector<32x1024xf32>
    %c0_16 = arith.constant 0 : index
    %c0_17 = arith.constant 0 : index
    %c0_18 = arith.constant 0 : index
    %26 = vector.load %arg7[%c0_16, %c0_17, %c0_18] : memref<1x32x1024xf32, #tpu.memory_space<vmem>>, vector<1x32x1024xf32>
    %27 = vector.shape_cast %26 : vector<1x32x1024xf32> to vector<32x1024xf32>
    %28 = vector.shape_cast %25 : vector<32x1024xf32> to vector<1x32x1024xf32>
    tpu.vector_store %arg7[%c0_16, %c0_17, %c0_18], %28 {strides = array<i32>} : memref<1x32x1024xf32, #tpu.memory_space<vmem>>, vector<1x32x1024xf32>,
    return
  }
  func.func @transform_0(%arg0: i32, %arg1: i32) -> (i32, i32, i32) {
    %c0_i32 = arith.constant 0 : i32
    %c0_i32_0 = arith.constant 0 : i32
    return %arg0, %c0_i32, %arg1 : i32, i32, i32
  }
  func.func @transform_1(%arg0: i32, %arg1: i32) -> (i32, i32) {
    %c0_i32 = arith.constant 0 : i32
    %c0_i32_0 = arith.constant 0 : i32
    %c0_i32_1 = arith.constant 0 : i32
    return %c0_i32, %c0_i32_0 : i32, i32
  }
  func.func @transform_2(%arg0: i32, %arg1: i32) -> (i32, i32) {
    %c0_i32 = arith.constant 0 : i32
    %c0_i32_0 = arith.constant 0 : i32
    %c0_i32_1 = arith.constant 0 : i32
    return %c0_i32, %c0_i32_0 : i32, i32
  }
  func.func @transform_3(%arg0: i32, %arg1: i32) -> (i32, i32) {
    %c0_i32 = arith.constant 0 : i32
    %c0_i32_0 = arith.constant 0 : i32
    %c0_i32_1 = arith.constant 0 : i32
    return %c0_i32, %c0_i32_0 : i32, i32
  }
  func.func @transform_4(%arg0: i32, %arg1: i32) -> (i32, i32) {
    %c0_i32 = arith.constant 0 : i32
    %c0_i32_0 = arith.constant 0 : i32
    %c0_i32_1 = arith.constant 0 : i32
    return %c0_i32, %c0_i32_0 : i32, i32
  }
  func.func @transform_5(%arg0: i32, %arg1: i32) -> (i32, i32, i32) {
    %c0_i32 = arith.constant 0 : i32
    %c0_i32_0 = arith.constant 0 : i32
    return %arg0, %c0_i32, %arg1 : i32, i32, i32
  }
}

</mosaic_0001>

<llo_original>
// kernel: tpu_custom_call.1
$region0: #{tpu_custom_call.1}
  #allocation0 [shape = 'u32[]', space=smem, size = 0x4, offset = 0x4, fixed_abs, tag = 'smem constant byte address 0x4 - core index']
  #allocation1 [shape = 'u32[144,128]{1,0:T(1,128)}', space=vmem, size = 0x12000, scoped, tag = 'internal scratch']
  %s0 = inlined_call_operand.hbm [shape: f32[2,32,1024], index: 0, kind: input, shape index: {}]
  %s1 = inlined_call_operand.vmem [shape: f32[64,32], index: 1, kind: input, shape index: {}]
  %s2 = inlined_call_operand.vmem [shape: f32[64,1], index: 2, kind: input, shape index: {}]
  %s3 = inlined_call_operand.vmem [shape: f32[32,64], index: 3, kind: input, shape index: {}]
  %s4 = inlined_call_operand.vmem [shape: f32[32,1], index: 4, kind: input, shape index: {}]
  %s5 = inlined_call_operand.hbm [shape: f32[2,32,1024], index: 5, kind: output, shape index: {}]
  %s6 = sld [smem:[#allocation0]]
  $region57: #{tpu_custom_call.1} parent=0
    _
  %s8 = ssub.s32 1, %s6
  %s9 = scalar_select 0, %s8, %s6
  $region1: #{tpu_custom_call.1} parent=0
    #allocation2 [shape = 'u8[262144]{0}', space=vmem, size = 0x40000, scoped, tag = 'input window, operand 0']
    #allocation3 [shape = 's32[2]{0}', space=sflag, size = 0x8, scoped, tag = 'scoped memory for tpu_custom_call.1']
    #allocation4 [shape = 's32[2]{0}', space=sflag, size = 0x8, scoped, tag = 'scoped memory for tpu_custom_call.1']
    #allocation5 [shape = 'u8[262144]{0}', space=vmem, size = 0x40000, scoped, tag = 'output window, operand 0']
    %10 = vsyncpa [#allocation3], 0
    %s11 = scalar_lea.sflag [#allocation3], 1
    %12 = vsyncpa %s11, 0
    %13 = vsyncpa [#allocation4], 0
    %s14 = scalar_lea.sflag [#allocation4], 1
    %15 = vsyncpa %s14, 0
    loop: start=0, step=1, limit=4
    $region2: #{tpu_custom_call.1} parent=1 // loop_pre_header
      _
    $region3: #{tpu_custom_call.1} parent=1 // loop_header
      %s17 = sphi 0, %s21
      %p18 = scmp.ge.s32.totalorder %s17, 4
      %s24 = sphi 0, %s36
      %s25 = sphi 0, %s32
      %s26 = sphi 0, %s24
      %s27 = sphi 0, %s25
      %s28 = sphi 0, %s26
      %s29 = sphi 0, %s27
      %s41 = sphi 0, %s43
      %s44 = sphi 0, %s41
      %s45 = sphi 0, %s44
      %s61 = sphi 0, %s45
      %s65 = sphi 0, %s65
      %s67 = sphi 0, %s65
      %s68 = sphi 0, %s67
      %s82 = sphi 0, %s68
      %s86 = sphi 0, %s86
      %s88 = sphi 0, %s86
      %s89 = sphi 0, %s88
      %s103 = sphi 0, %s89
      %s107 = sphi 0, %s107
      %s109 = sphi 0, %s107
      %s110 = sphi 0, %s109
      %s124 = sphi 0, %s110
      %s128 = sphi 0, %s128
      %s130 = sphi 0, %s128
      %s131 = sphi 0, %s130
      %s145 = sphi 0, %s131
      %s153 = sphi 0, %s155
      %s156 = sphi 0, %s153
      %s157 = sphi 0, %s156
      %s173 = sphi 0, %s157
    $region4: #{tpu_custom_call.1} parent=1 // loop_header_branch
      %20 = sbr.rel (%p18) target = $region8
    $region5: #{tpu_custom_call.1} parent=1 // loop_body
      %s22 = ssub.s32 %s17, 1
      %s23 = ssub.s32 %s17, 2
      %s30 = sadd.s32 1, %s25
      %p31 = scmp.ge.s32.totalorder %s30, 1
      %s32 = scalar_select %p31, 0, %s30
      %s33 = sadd.s32 1, %s24
      %s34 = scalar_select %p31, %s33, %s24
      %p35 = scmp.ge.s32.totalorder %s34, 2
      %s36 = scalar_select %p35, 0, %s34
      %s37 = ssub.s32 %s24, %s36
      %s38 = ssub.s32 %s25, %s32
      %s39 = sor.u32 %s37, %s38
      %p40 = scmp.eq.s32.totalorder %s39, 0
      %s42 = sadd.s32 %s41, 1
      %s43 = scalar_select %p40, %s41, %s42
      %p46 = pneg %p40
      %p47 = scmp.eq.s32.totalorder %s17, 1
      %p48 = por %p46, %p47
      %p49 = scmp.ne.s32.totalorder %s41, %s44
      %p50 = scmp.eq.s32.totalorder %s17, 0
      %p51 = por %p49, %p50
      %p52 = scmp.ne.s32.totalorder %s41, %s44
      %p53 = scmp.eq.s32.totalorder %s22, 1
      %p54 = por %p52, %p53
      %p55 = scmp.ne.s32.totalorder %s44, %s45
      %p56 = scmp.eq.s32.totalorder %s22, 0
      %p57 = por %p55, %p56
      %p58 = scmp.ne.s32.totalorder %s44, %s45
      %p59 = scmp.eq.s32.totalorder %s23, 1
      %p60 = por %p58, %p59
      %p62 = scmp.ne.s32.totalorder %s45, %s61
      %p63 = scmp.eq.s32.totalorder %s23, 0
      %p64 = por %p62, %p63
      %s66 = sadd.s32 %s65, 1
      %p69 = scmp.eq.s32.totalorder %s17, 1
      %p70 = scmp.ne.s32.totalorder %s65, %s67
      %p71 = scmp.eq.s32.totalorder %s17, 0
      %p72 = por %p70, %p71
      %p73 = scmp.ne.s32.totalorder %s65, %s67
      %p74 = scmp.eq.s32.totalorder %s22, 1
      %p75 = por %p73, %p74
      %p76 = scmp.ne.s32.totalorder %s67, %s68
      %p77 = scmp.eq.s32.totalorder %s22, 0
      %p78 = por %p76, %p77
      %p79 = scmp.ne.s32.totalorder %s67, %s68
      %p80 = scmp.eq.s32.totalorder %s23, 1
      %p81 = por %p79, %p80
      %p83 = scmp.ne.s32.totalorder %s68, %s82
      %p84 = scmp.eq.s32.totalorder %s23, 0
      %p85 = por %p83, %p84
      %s87 = sadd.s32 %s86, 1
      %p90 = scmp.eq.s32.totalorder %s17, 1
      %p91 = scmp.ne.s32.totalorder %s86, %s88
      %p92 = scmp.eq.s32.totalorder %s17, 0
      %p93 = por %p91, %p92
      %p94 = scmp.ne.s32.totalorder %s86, %s88
      %p95 = scmp.eq.s32.totalorder %s22, 1
      %p96 = por %p94, %p95
      %p97 = scmp.ne.s32.totalorder %s88, %s89
      %p98 = scmp.eq.s32.totalorder %s22, 0
      %p99 = por %p97, %p98
      %p100 = scmp.ne.s32.totalorder %s88, %s89
      %p101 = scmp.eq.s32.totalorder %s23, 1
      %p102 = por %p100, %p101
      %p104 = scmp.ne.s32.totalorder %s89, %s103
      %p105 = scmp.eq.s32.totalorder %s23, 0
      %p106 = por %p104, %p105
      %s108 = sadd.s32 %s107, 1
      %p111 = scmp.eq.s32.totalorder %s17, 1
      %p112 = scmp.ne.s32.totalorder %s107, %s109
      %p113 = scmp.eq.s32.totalorder %s17, 0
      %p114 = por %p112, %p113
      %p115 = scmp.ne.s32.totalorder %s107, %s109
      %p116 = scmp.eq.s32.totalorder %s22, 1
      %p117 = por %p115, %p116
      %p118 = scmp.ne.s32.totalorder %s109, %s110
      %p119 = scmp.eq.s32.totalorder %s22, 0
      %p120 = por %p118, %p119
      %p121 = scmp.ne.s32.totalorder %s109, %s110
      %p122 = scmp.eq.s32.totalorder %s23, 1
      %p123 = por %p121, %p122
      %p125 = scmp.ne.s32.totalorder %s110, %s124
      %p126 = scmp.eq.s32.totalorder %s23, 0
      %p127 = por %p125, %p126
      %s129 = sadd.s32 %s128, 1
      %p132 = scmp.eq.s32.totalorder %s17, 1
      %p133 = scmp.ne.s32.totalorder %s128, %s130
      %p134 = scmp.eq.s32.totalorder %s17, 0
      %p135 = por %p133, %p134
      %p136 = scmp.ne.s32.totalorder %s128, %s130
      %p137 = scmp.eq.s32.totalorder %s22, 1
      %p138 = por %p136, %p137
      %p139 = scmp.ne.s32.totalorder %s130, %s131
      %p140 = scmp.eq.s32.totalorder %s22, 0
      %p141 = por %p139, %p140
      %p142 = scmp.ne.s32.totalorder %s130, %s131
      %p143 = scmp.eq.s32.totalorder %s23, 1
      %p144 = por %p142, %p143
      %p146 = scmp.ne.s32.totalorder %s131, %s145
      %p147 = scmp.eq.s32.totalorder %s23, 0
      %p148 = por %p146, %p147
      %s149 = ssub.s32 %s24, %s36
      %s150 = ssub.s32 %s25, %s32
      %s151 = sor.u32 %s149, %s150
      %p152 = scmp.eq.s32.totalorder %s151, 0
      %s154 = sadd.s32 %s153, 1
      %s155 = scalar_select %p152, %s153, %s154
      %p158 = pneg %p152
      %p159 = scmp.eq.s32.totalorder %s17, 1
      %p160 = por %p158, %p159
      %p161 = scmp.ne.s32.totalorder %s153, %s156
      %p162 = scmp.eq.s32.totalorder %s17, 0
      %p163 = por %p161, %p162
      %p164 = scmp.ne.s32.totalorder %s153, %s156
      %p165 = scmp.eq.s32.totalorder %s22, 1
      %p166 = por %p164, %p165
      %p167 = scmp.ne.s32.totalorder %s156, %s157
      %p168 = scmp.eq.s32.totalorder %s22, 0
      %p169 = por %p167, %p168
      %p170 = scmp.ne.s32.totalorder %s156, %s157
      %p171 = scmp.eq.s32.totalorder %s23, 1
      %p172 = por %p170, %p171
      %p174 = scmp.ne.s32.totalorder %s157, %s173
      %p175 = scmp.eq.s32.totalorder %s23, 0
      %p176 = por %p174, %p175
      %p177 = scmp.le.s32.totalorder 1, %s17
      %p178 = scmp.lt.s32.totalorder %s17, 3
      %p179 = pnand %p177, %p178
      %p180 = pneg %p179
      // Predicated region
      $region9: #{tpu_custom_call.1} parent=5 // pred_check
        _
      $region10: #{tpu_custom_call.1} parent=5 // pred_check_branch
        %182 = sbr.rel (%p179) target = $region12
      $region11: #{tpu_custom_call.1} parent=5 // pred_region
        %s183 = ssub.s32 %s17, 1
        // Predicated region
        $region13: #{tpu_custom_call.1} parent=11 // pred_check
          %p184 = pneg %p78
        $region14: #{tpu_custom_call.1} parent=11 // pred_check_branch
          %186 = sbr.rel (%p184) target = $region16
        $region15: #{tpu_custom_call.1} parent=11 // pred_region
          _
        $region16: #{tpu_custom_call.1} parent=11 // pred_fallthru
          _
        // Predicated region
        $region17: #{tpu_custom_call.1} parent=11 // pred_check
          %p187 = pneg %p99
        $region18: #{tpu_custom_call.1} parent=11 // pred_check_branch
          %189 = sbr.rel (%p187) target = $region20
        $region19: #{tpu_custom_call.1} parent=11 // pred_region
          _
        $region20: #{tpu_custom_call.1} parent=11 // pred_fallthru
          _
        // Predicated region
        $region21: #{tpu_custom_call.1} parent=11 // pred_check
          %p190 = pneg %p120
        $region22: #{tpu_custom_call.1} parent=11 // pred_check_branch
          %192 = sbr.rel (%p190) target = $region24
        $region23: #{tpu_custom_call.1} parent=11 // pred_region
          _
        $region24: #{tpu_custom_call.1} parent=11 // pred_fallthru
          _
        // Predicated region
        $region25: #{tpu_custom_call.1} parent=11 // pred_check
          %p193 = pneg %p141
        $region26: #{tpu_custom_call.1} parent=11 // pred_check_branch
          %195 = sbr.rel (%p193) target = $region28
        $region27: #{tpu_custom_call.1} parent=11 // pred_region
          _
        $region28: #{tpu_custom_call.1} parent=11 // pred_fallthru
          _
      $region12: #{tpu_custom_call.1} parent=5 // pred_fallthru
        _
      %p196 = scmp.lt.s32.totalorder %s17, 2
      // Predicated region
      $region29: #{tpu_custom_call.1} parent=5 // pred_check
        %p197 = pneg %p196
      $region30: #{tpu_custom_call.1} parent=5 // pred_check_branch
        %199 = sbr.rel (%p197) target = $region32
      $region31: #{tpu_custom_call.1} parent=5 // pred_region
        // Predicated region
        $region33: #{tpu_custom_call.1} parent=31 // pred_check
          %p200 = pneg %p51
        $region34: #{tpu_custom_call.1} parent=31 // pred_check_branch
          %202 = sbr.rel (%p200) target = $region36
        $region35: #{tpu_custom_call.1} parent=31 // pred_region
          %s203 = sand.u32 %s41, 1
          %s204 = scalar_lea.sflag [#allocation3], %s203
          %s205 = sand.u32 %s41, 1
          %s206 = smul.addr %s205, 256
          %s207 = scalar_lea.vmem [#allocation2], %s206
          %s208 = smul.u32 8, %s25
          %s210 = ssub.s32 4096, 4096
          %211 = vsyncadd %s204, %s210
          %s212 = smul.addr %s24, 32
          %s213 = sadd.s32 %s208, %s212
          %s214 = smul.addr %s213, 128
          %s215 = scalar_lea.hbm %s0, %s214
          %s216 = sshll.u32 %s207, 4
          %s217 = int_to_ptr.vmem [resolvable:$true] %s216
          %222 = dma.hbm_to_vmem [thread:$0]  %s215, 4096, %s217, %s204, 1024, 1024, 64
        $region36: #{tpu_custom_call.1} parent=31 // pred_fallthru
          _
      $region32: #{tpu_custom_call.1} parent=5 // pred_fallthru
        _
      %p223 = scmp.le.s32.totalorder 1, %s17
      %p224 = scmp.lt.s32.totalorder %s17, 3
      %p225 = pnand %p223, %p224
      %p226 = pneg %p225
      // Predicated region
      $region37: #{tpu_custom_call.1} parent=5 // pred_check
        _
      $region38: #{tpu_custom_call.1} parent=5 // pred_check_branch
        %228 = sbr.rel (%p225) target = $region40
      $region39: #{tpu_custom_call.1} parent=5 // pred_region
        %s229 = ssub.s32 %s17, 1
        %s230 = sand.u32 %s44, 1
        %s231 = scalar_lea.sflag [#allocation3], %s230
        %s232 = sand.u32 %s44, 1
        %s233 = smul.addr %s232, 256
        %s234 = scalar_lea.vmem [#allocation2], %s233
        // Predicated region
        $region41: #{tpu_custom_call.1} parent=39 // pred_check
          %p235 = pneg %p57
        $region42: #{tpu_custom_call.1} parent=39 // pred_check_branch
          %237 = sbr.rel (%p235) target = $region44
        $region43: #{tpu_custom_call.1} parent=39 // pred_region
          %238 = dma.done %s231, 4096
        $region44: #{tpu_custom_call.1} parent=39 // pred_fallthru
          _
        %s239 = sand.u32 %s44, 1
        %s240 = scalar_lea.sflag [#allocation3], %s239
        %s241 = sand.u32 %s44, 1
        %s242 = smul.addr %s241, 256
        %s243 = scalar_lea.vmem [#allocation2], %s242
        %p244 = pneg %p57
        %p245 = pneg %p54
        %p246 = pneg %p78
        %p247 = pneg %p75
        %p248 = pneg %p99
        %p249 = pneg %p96
        %p250 = pneg %p120
        %p251 = pneg %p117
        %p252 = pneg %p141
        %p253 = pneg %p138
        %p254 = pneg %p169
        %p255 = pneg %p166
        %s256 = sand.u32 %s156, 1
        %s257 = scalar_lea.sflag [#allocation4], %s256
        %s258 = sand.u32 %s156, 1
        %s259 = smul.addr %s258, 256
        %s260 = scalar_lea.vmem [#allocation5], %s259
        %s261 = smul.u32 8, %s27
        %s262 = smul.u32 8, %s27
        %v263 = vld [vmem:[%s234] sm:$0xff]
        %v264 = vld [vmem:[%s234 + $0x8] sm:$0xff]
        %v265 = vld [vmem:[%s234 + $0x10] sm:$0xff]
        %v266 = vld [vmem:[%s234 + $0x18] sm:$0xff]
        %v267 = vld [vmem:[%s234 + $0x20] sm:$0xff]
        %v268 = vld [vmem:[%s234 + $0x28] sm:$0xff]
        %v269 = vld [vmem:[%s234 + $0x30] sm:$0xff]
        %v270 = vld [vmem:[%s234 + $0x38] sm:$0xff]
        %v271 = vld [vmem:[%s234 + $0x40] sm:$0xff]
        %v272 = vld [vmem:[%s234 + $0x48] sm:$0xff]
        %v273 = vld [vmem:[%s234 + $0x50] sm:$0xff]
        %v274 = vld [vmem:[%s234 + $0x58] sm:$0xff]
        %v275 = vld [vmem:[%s234 + $0x60] sm:$0xff]
        %v276 = vld [vmem:[%s234 + $0x68] sm:$0xff]
        %v277 = vld [vmem:[%s234 + $0x70] sm:$0xff]
        %v278 = vld [vmem:[%s234 + $0x78] sm:$0xff]
        %v279 = vld [vmem:[%s234 + $0x80] sm:$0xff]
        %v280 = vld [vmem:[%s234 + $0x88] sm:$0xff]
        %v281 = vld [vmem:[%s234 + $0x90] sm:$0xff]
        %v282 = vld [vmem:[%s234 + $0x98] sm:$0xff]
        %v283 = vld [vmem:[%s234 + $0xa0] sm:$0xff]
        %v284 = vld [vmem:[%s234 + $0xa8] sm:$0xff]
        %v285 = vld [vmem:[%s234 + $0xb0] sm:$0xff]
        %v286 = vld [vmem:[%s234 + $0xb8] sm:$0xff]
        %v287 = vld [vmem:[%s234 + $0xc0] sm:$0xff]
        %v288 = vld [vmem:[%s234 + $0xc8] sm:$0xff]
        %v289 = vld [vmem:[%s234 + $0xd0] sm:$0xff]
        %v290 = vld [vmem:[%s234 + $0xd8] sm:$0xff]
        %v291 = vld [vmem:[%s234 + $0xe0] sm:$0xff]
        %v292 = vld [vmem:[%s234 + $0xe8] sm:$0xff]
        %v293 = vld [vmem:[%s234 + $0xf0] sm:$0xff]
        %v294 = vld [vmem:[%s234 + $0xf8] sm:$0xff]
        %v295 = vld [vmem:[%s1] sm:$0xff]
        %v296 = vld [vmem:[%s1 + $0x8] sm:$0xff]
        %v297 = vld [vmem:[%s1 + $0x10] sm:$0xff]
        %v298 = vld [vmem:[%s1 + $0x18] sm:$0xff]
        %v299 = vld [vmem:[%s1 + $0x20] sm:$0xff]
        %v300 = vld [vmem:[%s1 + $0x28] sm:$0xff]
        %v301 = vld [vmem:[%s1 + $0x30] sm:$0xff]
        %v302 = vld [vmem:[%s1 + $0x38] sm:$0xff]
        %v303 = vld [vmem:[%s2] sm:$0xff]
        %v304 = vld [vmem:[%s2 + $0x8] sm:$0xff]
        %v305 = vld [vmem:[%s2 + $0x10] sm:$0xff]
        %v306 = vld [vmem:[%s2 + $0x18] sm:$0xff]
        %v307 = vld [vmem:[%s2 + $0x20] sm:$0xff]
        %v308 = vld [vmem:[%s2 + $0x28] sm:$0xff]
        %v309 = vld [vmem:[%s2 + $0x30] sm:$0xff]
        %v310 = vld [vmem:[%s2 + $0x38] sm:$0xff]
        %312 = vset.pattern.permute.xlu0 0
        %313 = vperm.xlu0 %312, %v303
        %v314 = vpop.permute.xlu0 %313
        %317 = vset.pattern.permute.xlu0 0
        %318 = vperm.xlu0 %317, %v304
        %v319 = vpop.permute.xlu0 %318
        %322 = vset.pattern.permute.xlu0 0
        %323 = vperm.xlu0 %322, %v305
        %v324 = vpop.permute.xlu0 %323
        %327 = vset.pattern.permute.xlu0 0
        %328 = vperm.xlu0 %327, %v306
        %v329 = vpop.permute.xlu0 %328
        %332 = vset.pattern.permute.xlu0 0
        %333 = vperm.xlu0 %332, %v307
        %v334 = vpop.permute.xlu0 %333
        %337 = vset.pattern.permute.xlu0 0
        %338 = vperm.xlu0 %337, %v308
        %v339 = vpop.permute.xlu0 %338
        %342 = vset.pattern.permute.xlu0 0
        %343 = vperm.xlu0 %342, %v309
        %v344 = vpop.permute.xlu0 %343
        %347 = vset.pattern.permute.xlu0 0
        %348 = vperm.xlu0 %347, %v310
        %v349 = vpop.permute.xlu0 %348
        %vm351 = vcmask 261120
        %v353 = vsel %vm351, %v295, 0
        %v356 = vsel %vm351, %v296, 0
        %v359 = vsel %vm351, %v297, 0
        %v362 = vsel %vm351, %v298, 0
        %v365 = vsel %vm351, %v299, 0
        %v368 = vsel %vm351, %v300, 0
        %v371 = vsel %vm351, %v301, 0
        %v374 = vsel %vm351, %v302, 0
        %376 = vmatprep.subr.mxu0 %v264
        %377 = vmatpush1.msra.mxu0 %v263
        %378 = vmatprep.subr.mxu0 %v272
        %379 = vmatpush1.msra.mxu0 %v271
        %380 = vmatprep.subr.mxu0 %v280
        %381 = vmatpush1.msra.mxu0 %v279
        %382 = vmatprep.subr.mxu0 %v288
        %383 = vmatpush1.msra.mxu0 %v287
        %384 = vmatprep.subr.mxu0 0.0
        %385 = vmatpush1.msra.mxu0 0.0
        %386 = vmatprep.subr.mxu0 0.0
        %387 = vmatpush1.msra.mxu0 0.0
        %388 = vmatprep.subr.mxu0 0.0
        %389 = vmatpush1.msra.mxu0 0.0
        %390 = vmatprep.subr.mxu0 0.0
        %391 = vmatpush1.msra.mxu0 0.0
        %392 = vmatprep.subr.mxu0 0.0
        %393 = vmatpush1.msra.mxu0 0.0
        %394 = vmatprep.subr.mxu0 0.0
        %395 = vmatpush1.msra.mxu0 0.0
        %396 = vmatprep.subr.mxu0 0.0
        %397 = vmatpush1.msra.mxu0 0.0
        %398 = vmatprep.subr.mxu0 0.0
        %399 = vmatpush1.msra.mxu0 0.0
        %400 = vmatprep.subr.mxu0 0.0
        %401 = vmatpush1.msra.mxu0 0.0
        %402 = vmatprep.subr.mxu0 0.0
        %403 = vmatpush1.msra.mxu0 0.0
        %404 = vmatprep.subr.mxu0 0.0
        %405 = vmatpush1.msra.mxu0 0.0
        %406 = vmatprep.subr.mxu0 0.0
        %407 = vmatpush1.msra.mxu0 0.0
        %408 = vmatprep.subr.mxu0 0.0
        %409 = vmatpush1.msra.mxu0 0.0
        %410 = vmatprep.subr.mxu0 0.0
        %411 = vmatpush1.msra.mxu0 0.0
        %412 = vmatprep.subr.mxu0 0.0
        %413 = vmatpush1.msra.mxu0 0.0
        %414 = vmatprep.subr.mxu0 0.0
        %415 = vmatpush1.msra.mxu0 0.0
        %416 = vmatprep.subr.mxu0 0.0
        %417 = vmatpush1.msra.mxu0 0.0
        %418 = vmatprep.subr.mxu0 0.0
        %419 = vmatpush1.msra.mxu0 0.0
        %420 = vmatprep.subr.mxu0 0.0
        %421 = vmatpush1.msra.mxu0 0.0
        %422 = vmatprep.subr.mxu0 0.0
        %423 = vmatpush1.msra.mxu0 0.0
        %424 = vmatprep.subr.mxu0 0.0
        %425 = vmatpush1.msra.mxu0 0.0
        %426 = vmatprep.subr.mxu0 0.0
        %427 = vmatpush1.msra.mxu0 0.0
        %428 = vmatprep.subr.mxu0 0.0
        %429 = vmatpush1.msra.mxu0 0.0
        %430 = vmatprep.subr.mxu0 0.0
        %431 = vmatpush1.msra.mxu0 0.0
        %432 = vmatprep.subr.mxu0 0.0
        %433 = vmatpush1.msra.mxu0 0.0
        %434 = vmatprep.subr.mxu0 0.0
        %435 = vmatpush1.msra.mxu0 0.0
        %436 = vmatprep.subr.mxu0 0.0
        %437 = vmatpush1.msra.mxu0 0.0
        %438 = vmatprep.subr.mxu0 0.0
        %439 = vmatpush1.msra.mxu0 0.0
        %440 = vmatprep.mubr.f32.mxu0 0.0
        %441 = vmatmul.mubr.f32.gmra.mrb[0].mxu0 %v353
        %v442 = vpop.f32.mrb[0].mxu0
        %v443 = vadd.f32 %v314, %v442
        %v444 = vpop.f32.mrb[0].mxu0
        %v445 = vadd.f32 %v314, %v444
        %446 = vmatprep.mubr.f32.mxu0 0.0
        %447 = vmatmul.mubr.f32.gmra.mrb[0].mxu0 %v356
        %v448 = vpop.f32.mrb[0].mxu0
        %v449 = vadd.f32 %v319, %v448
        %v450 = vpop.f32.mrb[0].mxu0
        %v451 = vadd.f32 %v319, %v450
        %452 = vmatprep.mubr.f32.mxu0 0.0
        %453 = vmatmul.mubr.f32.gmra.mrb[0].mxu0 %v359
        %v454 = vpop.f32.mrb[0].mxu0
        %v455 = vadd.f32 %v324, %v454
        %v456 = vpop.f32.mrb[0].mxu0
        %v457 = vadd.f32 %v324, %v456
        %458 = vmatprep.mubr.f32.mxu0 0.0
        %459 = vmatmul.mubr.f32.gmra.mrb[0].mxu0 %v362
        %v460 = vpop.f32.mrb[0].mxu0
        %v461 = vadd.f32 %v329, %v460
        %v462 = vpop.f32.mrb[0].mxu0
        %v463 = vadd.f32 %v329, %v462
        %464 = vmatprep.mubr.f32.mxu0 0.0
        %465 = vmatmul.mubr.f32.gmra.mrb[0].mxu0 %v365
        %v466 = vpop.f32.mrb[0].mxu0
        %v467 = vadd.f32 %v334, %v466
        %v468 = vpop.f32.mrb[0].mxu0
        %v469 = vadd.f32 %v334, %v468
        %470 = vmatprep.mubr.f32.mxu0 0.0
        %471 = vmatmul.mubr.f32.gmra.mrb[0].mxu0 %v368
        %v472 = vpop.f32.mrb[0].mxu0
        %v473 = vadd.f32 %v339, %v472
        %v474 = vpop.f32.mrb[0].mxu0
        %v475 = vadd.f32 %v339, %v474
        %476 = vmatprep.mubr.f32.mxu0 0.0
        %477 = vmatmul.mubr.f32.gmra.mrb[0].mxu0 %v371
        %v478 = vpop.f32.mrb[0].mxu0
        %v479 = vadd.f32 %v344, %v478
        %v480 = vpop.f32.mrb[0].mxu0
        %v481 = vadd.f32 %v344, %v480
        %482 = vmatprep.mubr.f32.mxu0 0.0
        %483 = vmatmul.mubr.f32.gmra.mrb[0].mxu0 %v374
        %v484 = vpop.f32.mrb[0].mxu0
        %v485 = vadd.f32 %v349, %v484
        %v486 = vpop.f32.mrb[0].mxu0
        %v487 = vadd.f32 %v349, %v486
        %488 = vdwg.mxu0
        %489 = vmatprep.subr.mxu0 %v266
        %490 = vmatpush1.msra.mxu0 %v265
        %491 = vmatprep.subr.mxu0 %v274
        %492 = vmatpush1.msra.mxu0 %v273
        %493 = vmatprep.subr.mxu0 %v282
        %494 = vmatpush1.msra.mxu0 %v281
        %495 = vmatprep.subr.mxu0 %v290
        %496 = vmatpush1.msra.mxu0 %v289
        %497 = vmatprep.subr.mxu0 0.0
        %498 = vmatpush1.msra.mxu0 0.0
        %499 = vmatprep.subr.mxu0 0.0
        %500 = vmatpush1.msra.mxu0 0.0
        %501 = vmatprep.subr.mxu0 0.0
        %502 = vmatpush1.msra.mxu0 0.0
        %503 = vmatprep.subr.mxu0 0.0
        %504 = vmatpush1.msra.mxu0 0.0
        %505 = vmatprep.subr.mxu0 0.0
        %506 = vmatpush1.msra.mxu0 0.0
        %507 = vmatprep.subr.mxu0 0.0
        %508 = vmatpush1.msra.mxu0 0.0
        %509 = vmatprep.subr.mxu0 0.0
        %510 = vmatpush1.msra.mxu0 0.0
        %511 = vmatprep.subr.mxu0 0.0
        %512 = vmatpush1.msra.mxu0 0.0
        %513 = vmatprep.subr.mxu0 0.0
        %514 = vmatpush1.msra.mxu0 0.0
        %515 = vmatprep.subr.mxu0 0.0
        %516 = vmatpush1.msra.mxu0 0.0
        %517 = vmatprep.subr.mxu0 0.0
        %518 = vmatpush1.msra.mxu0 0.0
        %519 = vmatprep.subr.mxu0 0.0
        %520 = vmatpush1.msra.mxu0 0.0
        %521 = vmatprep.subr.mxu0 0.0
        %522 = vmatpush1.msra.mxu0 0.0
        %523 = vmatprep.subr.mxu0 0.0
        %524 = vmatpush1.msra.mxu0 0.0
        %525 = vmatprep.subr.mxu0 0.0
        %526 = vmatpush1.msra.mxu0 0.0
        %527 = vmatprep.subr.mxu0 0.0
        %528 = vmatpush1.msra.mxu0 0.0
        %529 = vmatprep.subr.mxu0 0.0
        %530 = vmatpush1.msra.mxu0 0.0
        %531 = vmatprep.subr.mxu0 0.0
        %532 = vmatpush1.msra.mxu0 0.0
        %533 = vmatprep.subr.mxu0 0.0
        %534 = vmatpush1.msra.mxu0 0.0
        %535 = vmatprep.subr.mxu0 0.0
        %536 = vmatpush1.msra.mxu0 0.0
        %537 = vmatprep.subr.mxu0 0.0
        %538 = vmatpush1.msra.mxu0 0.0
        %539 = vmatprep.subr.mxu0 0.0
        %540 = vmatpush1.msra.mxu0 0.0
        %541 = vmatprep.subr.mxu0 0.0
        %542 = vmatpush1.msra.mxu0 0.0
        %543 = vmatprep.subr.mxu0 0.0
        %544 = vmatpush1.msra.mxu0 0.0
        %545 = vmatprep.subr.mxu0 0.0
        %546 = vmatpush1.msra.mxu0 0.0
        %547 = vmatprep.subr.mxu0 0.0
        %548 = vmatpush1.msra.mxu0 0.0
        %549 = vmatprep.subr.mxu0 0.0
        %550 = vmatpush1.msra.mxu0 0.0
        %551 = vmatprep.subr.mxu0 0.0
        %552 = vmatpush1.msra.mxu0 0.0
        %553 = vmatprep.mubr.f32.mxu0 0.0
        %554 = vmatmul.mubr.f32.gmra.mrb[0].mxu0 %v353
        %v555 = vpop.f32.mrb[0].mxu0
        %v556 = vadd.f32 %v314, %v555
        %v557 = vpop.f32.mrb[0].mxu0
        %v558 = vadd.f32 %v314, %v557
        %559 = vmatprep.mubr.f32.mxu0 0.0
        %560 = vmatmul.mubr.f32.gmra.mrb[0].mxu0 %v356
        %v561 = vpop.f32.mrb[0].mxu0
        %v562 = vadd.f32 %v319, %v561
        %v563 = vpop.f32.mrb[0].mxu0
        %v564 = vadd.f32 %v319, %v563
        %565 = vmatprep.mubr.f32.mxu0 0.0
        %566 = vmatmul.mubr.f32.gmra.mrb[0].mxu0 %v359
        %v567 = vpop.f32.mrb[0].mxu0
        %v568 = vadd.f32 %v324, %v567
        %v569 = vpop.f32.mrb[0].mxu0
        %v570 = vadd.f32 %v324, %v569
        %571 = vmatprep.mubr.f32.mxu0 0.0
        %572 = vmatmul.mubr.f32.gmra.mrb[0].mxu0 %v362
        %v573 = vpop.f32.mrb[0].mxu0
        %v574 = vadd.f32 %v329, %v573
        %v575 = vpop.f32.mrb[0].mxu0
        %v576 = vadd.f32 %v329, %v575
        %577 = vmatprep.mubr.f32.mxu0 0.0
        %578 = vmatmul.mubr.f32.gmra.mrb[0].mxu0 %v365
        %v579 = vpop.f32.mrb[0].mxu0
        %v580 = vadd.f32 %v334, %v579
        %v581 = vpop.f32.mrb[0].mxu0
        %v582 = vadd.f32 %v334, %v581
        %583 = vmatprep.mubr.f32.mxu0 0.0
        %584 = vmatmul.mubr.f32.gmra.mrb[0].mxu0 %v368
        %v585 = vpop.f32.mrb[0].mxu0
        %v586 = vadd.f32 %v339, %v585
        %v587 = vpop.f32.mrb[0].mxu0
        %v588 = vadd.f32 %v339, %v587
        %589 = vmatprep.mubr.f32.mxu0 0.0
        %590 = vmatmul.mubr.f32.gmra.mrb[0].mxu0 %v371
        %v591 = vpop.f32.mrb[0].mxu0
        %v592 = vadd.f32 %v344, %v591
        %v593 = vpop.f32.mrb[0].mxu0
        %v594 = vadd.f32 %v344, %v593
        %595 = vmatprep.mubr.f32.mxu0 0.0
        %596 = vmatmul.mubr.f32.gmra.mrb[0].mxu0 %v374
        %v597 = vpop.f32.mrb[0].mxu0
        %v598 = vadd.f32 %v349, %v597
        %v599 = vpop.f32.mrb[0].mxu0
        %v600 = vadd.f32 %v349, %v599
        %601 = vdwg.mxu0
        %602 = vmatprep.subr.mxu0 %v268
        %603 = vmatpush1.msra.mxu0 %v267
        %604 = vmatprep.subr.mxu0 %v276
        %605 = vmatpush1.msra.mxu0 %v275
        %606 = vmatprep.subr.mxu0 %v284
        %607 = vmatpush1.msra.mxu0 %v283
        %608 = vmatprep.subr.mxu0 %v292
        %609 = vmatpush1.msra.mxu0 %v291
        %610 = vmatprep.subr.mxu0 0.0
        %611 = vmatpush1.msra.mxu0 0.0
        %612 = vmatprep.subr.mxu0 0.0
        %613 = vmatpush1.msra.mxu0 0.0
        %614 = vmatprep.subr.mxu0 0.0
        %615 = vmatpush1.msra.mxu0 0.0
        %616 = vmatprep.subr.mxu0 0.0
        %617 = vmatpush1.msra.mxu0 0.0
        %618 = vmatprep.subr.mxu0 0.0
        %619 = vmatpush1.msra.mxu0 0.0
        %620 = vmatprep.subr.mxu0 0.0
        %621 = vmatpush1.msra.mxu0 0.0
        %622 = vmatprep.subr.mxu0 0.0
        %623 = vmatpush1.msra.mxu0 0.0
        %624 = vmatprep.subr.mxu0 0.0
        %625 = vmatpush1.msra.mxu0 0.0
        %626 = vmatprep.subr.mxu0 0.0
        %627 = vmatpush1.msra.mxu0 0.0
        %628 = vmatprep.subr.mxu0 0.0
        %629 = vmatpush1.msra.mxu0 0.0
        %630 = vmatprep.subr.mxu0 0.0
        %631 = vmatpush1.msra.mxu0 0.0
        %632 = vmatprep.subr.mxu0 0.0
        %633 = vmatpush1.msra.mxu0 0.0
        %634 = vmatprep.subr.mxu0 0.0
        %635 = vmatpush1.msra.mxu0 0.0
        %636 = vmatprep.subr.mxu0 0.0
        %637 = vmatpush1.msra.mxu0 0.0
        %638 = vmatprep.subr.mxu0 0.0
        %639 = vmatpush1.msra.mxu0 0.0
        %640 = vmatprep.subr.mxu0 0.0
        %641 = vmatpush1.msra.mxu0 0.0
        %642 = vmatprep.subr.mxu0 0.0
        %643 = vmatpush1.msra.mxu0 0.0
        %644 = vmatprep.subr.mxu0 0.0
        %645 = vmatpush1.msra.mxu0 0.0
        %646 = vmatprep.subr.mxu0 0.0
        %647 = vmatpush1.msra.mxu0 0.0
        %648 = vmatprep.subr.mxu0 0.0
        %649 = vmatpush1.msra.mxu0 0.0
        %650 = vmatprep.subr.mxu0 0.0
        %651 = vmatpush1.msra.mxu0 0.0
        %652 = vmatprep.subr.mxu0 0.0
        %653 = vmatpush1.msra.mxu0 0.0
        %654 = vmatprep.subr.mxu0 0.0
        %655 = vmatpush1.msra.mxu0 0.0
        %656 = vmatprep.subr.mxu0 0.0
        %657 = vmatpush1.msra.mxu0 0.0
        %658 = vmatprep.subr.mxu0 0.0
        %659 = vmatpush1.msra.mxu0 0.0
        %660 = vmatprep.subr.mxu0 0.0
        %661 = vmatpush1.msra.mxu0 0.0
        %662 = vmatprep.subr.mxu0 0.0
        %663 = vmatpush1.msra.mxu0 0.0
        %664 = vmatprep.subr.mxu0 0.0
        %665 = vmatpush1.msra.mxu0 0.0
        %666 = vmatprep.mubr.f32.mxu0 0.0
        %667 = vmatmul.mubr.f32.gmra.mrb[0].mxu0 %v353
        %v668 = vpop.f32.mrb[0].mxu0
        %v669 = vadd.f32 %v314, %v668
        %v670 = vpop.f32.mrb[0].mxu0
        %v671 = vadd.f32 %v314, %v670
        %672 = vmatprep.mubr.f32.mxu0 0.0
        %673 = vmatmul.mubr.f32.gmra.mrb[0].mxu0 %v356
        %v674 = vpop.f32.mrb[0].mxu0
        %v675 = vadd.f32 %v319, %v674
        %v676 = vpop.f32.mrb[0].mxu0
        %v677 = vadd.f32 %v319, %v676
        %678 = vmatprep.mubr.f32.mxu0 0.0
        %679 = vmatmul.mubr.f32.gmra.mrb[0].mxu0 %v359
        %v680 = vpop.f32.mrb[0].mxu0
        %v681 = vadd.f32 %v324, %v680
        %v682 = vpop.f32.mrb[0].mxu0
        %v683 = vadd.f32 %v324, %v682
        %684 = vmatprep.mubr.f32.mxu0 0.0
        %685 = vmatmul.mubr.f32.gmra.mrb[0].mxu0 %v362
        %v686 = vpop.f32.mrb[0].mxu0
        %v687 = vadd.f32 %v329, %v686
        %v688 = vpop.f32.mrb[0].mxu0
        %v689 = vadd.f32 %v329, %v688
        %690 = vmatprep.mubr.f32.mxu0 0.0
        %691 = vmatmul.mubr.f32.gmra.mrb[0].mxu0 %v365
        %v692 = vpop.f32.mrb[0].mxu0
        %v693 = vadd.f32 %v334, %v692
        %v694 = vpop.f32.mrb[0].mxu0
        %v695 = vadd.f32 %v334, %v694
        %696 = vmatprep.mubr.f32.mxu0 0.0
        %697 = vmatmul.mubr.f32.gmra.mrb[0].mxu0 %v368
        %v698 = vpop.f32.mrb[0].mxu0
        %v699 = vadd.f32 %v339, %v698
        %v700 = vpop.f32.mrb[0].mxu0
        %v701 = vadd.f32 %v339, %v700
        %702 = vmatprep.mubr.f32.mxu0 0.0
        %703 = vmatmul.mubr.f32.gmra.mrb[0].mxu0 %v371
        %v704 = vpop.f32.mrb[0].mxu0
        %v705 = vadd.f32 %v344, %v704
        %v706 = vpop.f32.mrb[0].mxu0
        %v707 = vadd.f32 %v344, %v706
        %708 = vmatprep.mubr.f32.mxu0 0.0
        %709 = vmatmul.mubr.f32.gmra.mrb[0].mxu0 %v374
        %v710 = vpop.f32.mrb[0].mxu0
        %v711 = vadd.f32 %v349, %v710
        %v712 = vpop.f32.mrb[0].mxu0
        %v713 = vadd.f32 %v349, %v712
        %714 = vdwg.mxu0
        %715 = vmatprep.subr.mxu0 %v270
        %716 = vmatpush1.msra.mxu0 %v269
        %717 = vmatprep.subr.mxu0 %v278
        %718 = vmatpush1.msra.mxu0 %v277
        %719 = vmatprep.subr.mxu0 %v286
        %720 = vmatpush1.msra.mxu0 %v285
        %721 = vmatprep.subr.mxu0 %v294
        %722 = vmatpush1.msra.mxu0 %v293
        %723 = vmatprep.subr.mxu0 0.0
        %724 = vmatpush1.msra.mxu0 0.0
        %725 = vmatprep.subr.mxu0 0.0
        %726 = vmatpush1.msra.mxu0 0.0
        %727 = vmatprep.subr.mxu0 0.0
        %728 = vmatpush1.msra.mxu0 0.0
        %729 = vmatprep.subr.mxu0 0.0
        %730 = vmatpush1.msra.mxu0 0.0
        %731 = vmatprep.subr.mxu0 0.0
        %732 = vmatpush1.msra.mxu0 0.0
        %733 = vmatprep.subr.mxu0 0.0
        %734 = vmatpush1.msra.mxu0 0.0
        %735 = vmatprep.subr.mxu0 0.0
        %736 = vmatpush1.msra.mxu0 0.0
        %737 = vmatprep.subr.mxu0 0.0
        %738 = vmatpush1.msra.mxu0 0.0
        %739 = vmatprep.subr.mxu0 0.0
        %740 = vmatpush1.msra.mxu0 0.0
        %741 = vmatprep.subr.mxu0 0.0
        %742 = vmatpush1.msra.mxu0 0.0
        %743 = vmatprep.subr.mxu0 0.0
        %744 = vmatpush1.msra.mxu0 0.0
        %745 = vmatprep.subr.mxu0 0.0
        %746 = vmatpush1.msra.mxu0 0.0
        %747 = vmatprep.subr.mxu0 0.0
        %748 = vmatpush1.msra.mxu0 0.0
        %749 = vmatprep.subr.mxu0 0.0
        %750 = vmatpush1.msra.mxu0 0.0
        %751 = vmatprep.subr.mxu0 0.0
        %752 = vmatpush1.msra.mxu0 0.0
        %753 = vmatprep.subr.mxu0 0.0
        %754 = vmatpush1.msra.mxu0 0.0
        %755 = vmatprep.subr.mxu0 0.0
        %756 = vmatpush1.msra.mxu0 0.0
        %757 = vmatprep.subr.mxu0 0.0
        %758 = vmatpush1.msra.mxu0 0.0
        %759 = vmatprep.subr.mxu0 0.0
        %760 = vmatpush1.msra.mxu0 0.0
        %761 = vmatprep.subr.mxu0 0.0
        %762 = vmatpush1.msra.mxu0 0.0
        %763 = vmatprep.subr.mxu0 0.0
        %764 = vmatpush1.msra.mxu0 0.0
        %765 = vmatprep.subr.mxu0 0.0
        %766 = vmatpush1.msra.mxu0 0.0
        %767 = vmatprep.subr.mxu0 0.0
        %768 = vmatpush1.msra.mxu0 0.0
        %769 = vmatprep.subr.mxu0 0.0
        %770 = vmatpush1.msra.mxu0 0.0
        %771 = vmatprep.subr.mxu0 0.0
        %772 = vmatpush1.msra.mxu0 0.0
        %773 = vmatprep.subr.mxu0 0.0
        %774 = vmatpush1.msra.mxu0 0.0
        %775 = vmatprep.subr.mxu0 0.0
        %776 = vmatpush1.msra.mxu0 0.0
        %777 = vmatprep.subr.mxu0 0.0
        %778 = vmatpush1.msra.mxu0 0.0
        %779 = vmatprep.mubr.f32.mxu0 0.0
        %780 = vmatmul.mubr.f32.gmra.mrb[0].mxu0 %v353
        %v781 = vpop.f32.mrb[0].mxu0
        %v782 = vadd.f32 %v314, %v781
        %v783 = vpop.f32.mrb[0].mxu0
        %v784 = vadd.f32 %v314, %v783
        %785 = vmatprep.mubr.f32.mxu0 0.0
        %786 = vmatmul.mubr.f32.gmra.mrb[0].mxu0 %v356
        %v787 = vpop.f32.mrb[0].mxu0
        %v788 = vadd.f32 %v319, %v787
        %v789 = vpop.f32.mrb[0].mxu0
        %v790 = vadd.f32 %v319, %v789
        %791 = vmatprep.mubr.f32.mxu0 0.0
        %792 = vmatmul.mubr.f32.gmra.mrb[0].mxu0 %v359
        %v793 = vpop.f32.mrb[0].mxu0
        %v794 = vadd.f32 %v324, %v793
        %v795 = vpop.f32.mrb[0].mxu0
        %v796 = vadd.f32 %v324, %v795
        %797 = vmatprep.mubr.f32.mxu0 0.0
        %798 = vmatmul.mubr.f32.gmra.mrb[0].mxu0 %v362
        %v799 = vpop.f32.mrb[0].mxu0
        %v800 = vadd.f32 %v329, %v799
        %v801 = vpop.f32.mrb[0].mxu0
        %v802 = vadd.f32 %v329, %v801
        %803 = vmatprep.mubr.f32.mxu0 0.0
        %804 = vmatmul.mubr.f32.gmra.mrb[0].mxu0 %v365
        %v805 = vpop.f32.mrb[0].mxu0
        %v806 = vadd.f32 %v334, %v805
        %v807 = vpop.f32.mrb[0].mxu0
        %v808 = vadd.f32 %v334, %v807
        %809 = vmatprep.mubr.f32.mxu0 0.0
        %810 = vmatmul.mubr.f32.gmra.mrb[0].mxu0 %v368
        %v811 = vpop.f32.mrb[0].mxu0
        %v812 = vadd.f32 %v339, %v811
        %v813 = vpop.f32.mrb[0].mxu0
        %v814 = vadd.f32 %v339, %v813
        %815 = vmatprep.mubr.f32.mxu0 0.0
        %816 = vmatmul.mubr.f32.gmra.mrb[0].mxu0 %v371
        %v817 = vpop.f32.mrb[0].mxu0
        %v818 = vadd.f32 %v344, %v817
        %v819 = vpop.f32.mrb[0].mxu0
        %v820 = vadd.f32 %v344, %v819
        %821 = vmatprep.mubr.f32.mxu0 0.0
        %822 = vmatmul.mubr.f32.gmra.mrb[0].mxu0 %v374
        %v823 = vpop.f32.mrb[0].mxu0
        %v824 = vadd.f32 %v349, %v823
        %v825 = vpop.f32.mrb[0].mxu0
        %v826 = vadd.f32 %v349, %v825
        %827 = vdwg.mxu0
        %v828 = vmul.f32 %v443, 0.7978846
        %v829 = vmul.f32 %v445, 0.7978846
        %v830 = vmul.f32 %v556, 0.7978846
        %v831 = vmul.f32 %v558, 0.7978846
        %v832 = vmul.f32 %v669, 0.7978846
        %v833 = vmul.f32 %v671, 0.7978846
        %v834 = vmul.f32 %v782, 0.7978846
        %v835 = vmul.f32 %v784, 0.7978846
        %v836 = vmul.f32 %v449, 0.7978846
        %v837 = vmul.f32 %v451, 0.7978846
        %v838 = vmul.f32 %v562, 0.7978846
        %v839 = vmul.f32 %v564, 0.7978846
        %v840 = vmul.f32 %v675, 0.7978846
        %v841 = vmul.f32 %v677, 0.7978846
        %v842 = vmul.f32 %v788, 0.7978846
        %v843 = vmul.f32 %v790, 0.7978846
        %v844 = vmul.f32 %v455, 0.7978846
        %v845 = vmul.f32 %v457, 0.7978846
        %v846 = vmul.f32 %v568, 0.7978846
        %v847 = vmul.f32 %v570, 0.7978846
        %v848 = vmul.f32 %v681, 0.7978846
        %v849 = vmul.f32 %v683, 0.7978846
        %v850 = vmul.f32 %v794, 0.7978846
        %v851 = vmul.f32 %v796, 0.7978846
        %v852 = vmul.f32 %v461, 0.7978846
        %v853 = vmul.f32 %v463, 0.7978846
        %v854 = vmul.f32 %v574, 0.7978846
        %v855 = vmul.f32 %v576, 0.7978846
        %v856 = vmul.f32 %v687, 0.7978846
        %v857 = vmul.f32 %v689, 0.7978846
        %v858 = vmul.f32 %v800, 0.7978846
        %v859 = vmul.f32 %v802, 0.7978846
        %v860 = vmul.f32 %v467, 0.7978846
        %v861 = vmul.f32 %v469, 0.7978846
        %v862 = vmul.f32 %v580, 0.7978846
        %v863 = vmul.f32 %v582, 0.7978846
        %v864 = vmul.f32 %v693, 0.7978846
        %v865 = vmul.f32 %v695, 0.7978846
        %v866 = vmul.f32 %v806, 0.7978846
        %v867 = vmul.f32 %v808, 0.7978846
        %v868 = vmul.f32 %v473, 0.7978846
        %v869 = vmul.f32 %v475, 0.7978846
        %v870 = vmul.f32 %v586, 0.7978846
        %v871 = vmul.f32 %v588, 0.7978846
        %v872 = vmul.f32 %v699, 0.7978846
        %v873 = vmul.f32 %v701, 0.7978846
        %v874 = vmul.f32 %v812, 0.7978846
        %v875 = vmul.f32 %v814, 0.7978846
        %v876 = vmul.f32 %v479, 0.7978846
        %v877 = vmul.f32 %v481, 0.7978846
        %v878 = vmul.f32 %v592, 0.7978846
        %v879 = vmul.f32 %v594, 0.7978846
        %v880 = vmul.f32 %v705, 0.7978846
        %v881 = vmul.f32 %v707, 0.7978846
        %v882 = vmul.f32 %v818, 0.7978846
        %v883 = vmul.f32 %v820, 0.7978846
        %v884 = vmul.f32 %v485, 0.7978846
        %v885 = vmul.f32 %v487, 0.7978846
        %v886 = vmul.f32 %v598, 0.7978846
        %v887 = vmul.f32 %v600, 0.7978846
        %v888 = vmul.f32 %v711, 0.7978846
        %v889 = vmul.f32 %v713, 0.7978846
        %v890 = vmul.f32 %v824, 0.7978846
        %v891 = vmul.f32 %v826, 0.7978846
        %v892 = vmul.f32 %v443, 0.044715
        %v893 = vmul.f32 %v445, 0.044715
        %v894 = vmul.f32 %v556, 0.044715
        %v895 = vmul.f32 %v558, 0.044715
        %v896 = vmul.f32 %v669, 0.044715
        %v897 = vmul.f32 %v671, 0.044715
        %v898 = vmul.f32 %v782, 0.044715
        %v899 = vmul.f32 %v784, 0.044715
        %v900 = vmul.f32 %v449, 0.044715
        %v901 = vmul.f32 %v451, 0.044715
        %v902 = vmul.f32 %v562, 0.044715
        %v903 = vmul.f32 %v564, 0.044715
        %v904 = vmul.f32 %v675, 0.044715
        %v905 = vmul.f32 %v677, 0.044715
        %v906 = vmul.f32 %v788, 0.044715
        %v907 = vmul.f32 %v790, 0.044715
        %v908 = vmul.f32 %v455, 0.044715
        %v909 = vmul.f32 %v457, 0.044715
        %v910 = vmul.f32 %v568, 0.044715
        %v911 = vmul.f32 %v570, 0.044715
        %v912 = vmul.f32 %v681, 0.044715
        %v913 = vmul.f32 %v683, 0.044715
        %v914 = vmul.f32 %v794, 0.044715
        %v915 = vmul.f32 %v796, 0.044715
        %v916 = vmul.f32 %v461, 0.044715
        %v917 = vmul.f32 %v463, 0.044715
        %v918 = vmul.f32 %v574, 0.044715
        %v919 = vmul.f32 %v576, 0.044715
        %v920 = vmul.f32 %v687, 0.044715
        %v921 = vmul.f32 %v689, 0.044715
        %v922 = vmul.f32 %v800, 0.044715
        %v923 = vmul.f32 %v802, 0.044715
        %v924 = vmul.f32 %v467, 0.044715
        %v925 = vmul.f32 %v469, 0.044715
        %v926 = vmul.f32 %v580, 0.044715
        %v927 = vmul.f32 %v582, 0.044715
        %v928 = vmul.f32 %v693, 0.044715
        %v929 = vmul.f32 %v695, 0.044715
        %v930 = vmul.f32 %v806, 0.044715
        %v931 = vmul.f32 %v808, 0.044715
        %v932 = vmul.f32 %v473, 0.044715
        %v933 = vmul.f32 %v475, 0.044715
        %v934 = vmul.f32 %v586, 0.044715
        %v935 = vmul.f32 %v588, 0.044715
        %v936 = vmul.f32 %v699, 0.044715
        %v937 = vmul.f32 %v701, 0.044715
        %v938 = vmul.f32 %v812, 0.044715
        %v939 = vmul.f32 %v814, 0.044715
        %v940 = vmul.f32 %v479, 0.044715
        %v941 = vmul.f32 %v481, 0.044715
        %v942 = vmul.f32 %v592, 0.044715
        %v943 = vmul.f32 %v594, 0.044715
        %v944 = vmul.f32 %v705, 0.044715
        %v945 = vmul.f32 %v707, 0.044715
        %v946 = vmul.f32 %v818, 0.044715
        %v947 = vmul.f32 %v820, 0.044715
        %v948 = vmul.f32 %v485, 0.044715
        %v949 = vmul.f32 %v487, 0.044715
        %v950 = vmul.f32 %v598, 0.044715
        %v951 = vmul.f32 %v600, 0.044715
        %v952 = vmul.f32 %v711, 0.044715
        %v953 = vmul.f32 %v713, 0.044715
        %v954 = vmul.f32 %v824, 0.044715
        %v955 = vmul.f32 %v826, 0.044715
        %v956 = vmul.f32 %v892, %v443
        %v957 = vmul.f32 %v893, %v445
        %v958 = vmul.f32 %v894, %v556
        %v959 = vmul.f32 %v895, %v558
        %v960 = vmul.f32 %v896, %v669
        %v961 = vmul.f32 %v897, %v671
        %v962 = vmul.f32 %v898, %v782
        %v963 = vmul.f32 %v899, %v784
        %v964 = vmul.f32 %v900, %v449
        %v965 = vmul.f32 %v901, %v451
        %v966 = vmul.f32 %v902, %v562
        %v967 = vmul.f32 %v903, %v564
        %v968 = vmul.f32 %v904, %v675
        %v969 = vmul.f32 %v905, %v677
        %v970 = vmul.f32 %v906, %v788
        %v971 = vmul.f32 %v907, %v790
        %v972 = vmul.f32 %v908, %v455
        %v973 = vmul.f32 %v909, %v457
        %v974 = vmul.f32 %v910, %v568
        %v975 = vmul.f32 %v911, %v570
        %v976 = vmul.f32 %v912, %v681
        %v977 = vmul.f32 %v913, %v683
        %v978 = vmul.f32 %v914, %v794
        %v979 = vmul.f32 %v915, %v796
        %v980 = vmul.f32 %v916, %v461
        %v981 = vmul.f32 %v917, %v463
        %v982 = vmul.f32 %v918, %v574
        %v983 = vmul.f32 %v919, %v576
        %v984 = vmul.f32 %v920, %v687
        %v985 = vmul.f32 %v921, %v689
        %v986 = vmul.f32 %v922, %v800
        %v987 = vmul.f32 %v923, %v802
        %v988 = vmul.f32 %v924, %v467
        %v989 = vmul.f32 %v925, %v469
        %v990 = vmul.f32 %v926, %v580
        %v991 = vmul.f32 %v927, %v582
        %v992 = vmul.f32 %v928, %v693
        %v993 = vmul.f32 %v929, %v695
        %v994 = vmul.f32 %v930, %v806
        %v995 = vmul.f32 %v931, %v808
        %v996 = vmul.f32 %v932, %v473
        %v997 = vmul.f32 %v933, %v475
        %v998 = vmul.f32 %v934, %v586
        %v999 = vmul.f32 %v935, %v588
        %v1000 = vmul.f32 %v936, %v699
        %v1001 = vmul.f32 %v937, %v701
        %v1002 = vmul.f32 %v938, %v812
        %v1003 = vmul.f32 %v939, %v814
        %v1004 = vmul.f32 %v940, %v479
        %v1005 = vmul.f32 %v941, %v481
        %v1006 = vmul.f32 %v942, %v592
        %v1007 = vmul.f32 %v943, %v594
        %v1008 = vmul.f32 %v944, %v705
        %v1009 = vmul.f32 %v945, %v707
        %v1010 = vmul.f32 %v946, %v818
        %v1011 = vmul.f32 %v947, %v820
        %v1012 = vmul.f32 %v948, %v485
        %v1013 = vmul.f32 %v949, %v487
        %v1014 = vmul.f32 %v950, %v598
        %v1015 = vmul.f32 %v951, %v600
        %v1016 = vmul.f32 %v952, %v711
        %v1017 = vmul.f32 %v953, %v713
        %v1018 = vmul.f32 %v954, %v824
        %v1019 = vmul.f32 %v955, %v826
        %v1020 = vadd.f32 %v956, 1.0
        %v1021 = vadd.f32 %v957, 1.0
        %v1022 = vadd.f32 %v958, 1.0
        %v1023 = vadd.f32 %v959, 1.0
        %v1024 = vadd.f32 %v960, 1.0
        %v1025 = vadd.f32 %v961, 1.0
        %v1026 = vadd.f32 %v962, 1.0
        %v1027 = vadd.f32 %v963, 1.0
        %v1028 = vadd.f32 %v964, 1.0
        %v1029 = vadd.f32 %v965, 1.0
        %v1030 = vadd.f32 %v966, 1.0
        %v1031 = vadd.f32 %v967, 1.0
        %v1032 = vadd.f32 %v968, 1.0
        %v1033 = vadd.f32 %v969, 1.0
        %v1034 = vadd.f32 %v970, 1.0
        %v1035 = vadd.f32 %v971, 1.0
        %v1036 = vadd.f32 %v972, 1.0
        %v1037 = vadd.f32 %v973, 1.0
        %v1038 = vadd.f32 %v974, 1.0
        %v1039 = vadd.f32 %v975, 1.0
        %v1040 = vadd.f32 %v976, 1.0
        %v1041 = vadd.f32 %v977, 1.0
        %v1042 = vadd.f32 %v978, 1.0
        %v1043 = vadd.f32 %v979, 1.0
        %v1044 = vadd.f32 %v980, 1.0
        %v1045 = vadd.f32 %v981, 1.0
        %v1046 = vadd.f32 %v982, 1.0
        %v1047 = vadd.f32 %v983, 1.0
        %v1048 = vadd.f32 %v984, 1.0
        %v1049 = vadd.f32 %v985, 1.0
        %v1050 = vadd.f32 %v986, 1.0
        %v1051 = vadd.f32 %v987, 1.0
        %v1052 = vadd.f32 %v988, 1.0
        %v1053 = vadd.f32 %v989, 1.0
        %v1054 = vadd.f32 %v990, 1.0
        %v1055 = vadd.f32 %v991, 1.0
        %v1056 = vadd.f32 %v992, 1.0
        %v1057 = vadd.f32 %v993, 1.0
        %v1058 = vadd.f32 %v994, 1.0
        %v1059 = vadd.f32 %v995, 1.0
        %v1060 = vadd.f32 %v996, 1.0
        %v1061 = vadd.f32 %v997, 1.0
        %v1062 = vadd.f32 %v998, 1.0
        %v1063 = vadd.f32 %v999, 1.0
        %v1064 = vadd.f32 %v1000, 1.0
        %v1065 = vadd.f32 %v1001, 1.0
        %v1066 = vadd.f32 %v1002, 1.0
        %v1067 = vadd.f32 %v1003, 1.0
        %v1068 = vadd.f32 %v1004, 1.0
        %v1069 = vadd.f32 %v1005, 1.0
        %v1070 = vadd.f32 %v1006, 1.0
        %v1071 = vadd.f32 %v1007, 1.0
        %v1072 = vadd.f32 %v1008, 1.0
        %v1073 = vadd.f32 %v1009, 1.0
        %v1074 = vadd.f32 %v1010, 1.0
        %v1075 = vadd.f32 %v1011, 1.0
        %v1076 = vadd.f32 %v1012, 1.0
        %v1077 = vadd.f32 %v1013, 1.0
        %v1078 = vadd.f32 %v1014, 1.0
        %v1079 = vadd.f32 %v1015, 1.0
        %v1080 = vadd.f32 %v1016, 1.0
        %v1081 = vadd.f32 %v1017, 1.0
        %v1082 = vadd.f32 %v1018, 1.0
        %v1083 = vadd.f32 %v1019, 1.0
        %v1084 = vmul.f32 %v828, %v1020
        %v1085 = vmul.f32 %v829, %v1021
        %v1086 = vmul.f32 %v830, %v1022
        %v1087 = vmul.f32 %v831, %v1023
        %v1088 = vmul.f32 %v832, %v1024
        %v1089 = vmul.f32 %v833, %v1025
        %v1090 = vmul.f32 %v834, %v1026
        %v1091 = vmul.f32 %v835, %v1027
        %v1092 = vmul.f32 %v836, %v1028
        %v1093 = vmul.f32 %v837, %v1029
        %v1094 = vmul.f32 %v838, %v1030
        %v1095 = vmul.f32 %v839, %v1031
        %v1096 = vmul.f32 %v840, %v1032
        %v1097 = vmul.f32 %v841, %v1033
        %v1098 = vmul.f32 %v842, %v1034
        %v1099 = vmul.f32 %v843, %v1035
        %v1100 = vmul.f32 %v844, %v1036
        %v1101 = vmul.f32 %v845, %v1037
        %v1102 = vmul.f32 %v846, %v1038
        %v1103 = vmul.f32 %v847, %v1039
        %v1104 = vmul.f32 %v848, %v1040
        %v1105 = vmul.f32 %v849, %v1041
        %v1106 = vmul.f32 %v850, %v1042
        %v1107 = vmul.f32 %v851, %v1043
        %v1108 = vmul.f32 %v852, %v1044
        %v1109 = vmul.f32 %v853, %v1045
        %v1110 = vmul.f32 %v854, %v1046
        %v1111 = vmul.f32 %v855, %v1047
        %v1112 = vmul.f32 %v856, %v1048
        %v1113 = vmul.f32 %v857, %v1049
        %v1114 = vmul.f32 %v858, %v1050
        %v1115 = vmul.f32 %v859, %v1051
        %v1116 = vmul.f32 %v860, %v1052
        %v1117 = vmul.f32 %v861, %v1053
        %v1118 = vmul.f32 %v862, %v1054
        %v1119 = vmul.f32 %v863, %v1055
        %v1120 = vmul.f32 %v864, %v1056
        %v1121 = vmul.f32 %v865, %v1057
        %v1122 = vmul.f32 %v866, %v1058
        %v1123 = vmul.f32 %v867, %v1059
        %v1124 = vmul.f32 %v868, %v1060
        %v1125 = vmul.f32 %v869, %v1061
        %v1126 = vmul.f32 %v870, %v1062
        %v1127 = vmul.f32 %v871, %v1063
        %v1128 = vmul.f32 %v872, %v1064
        %v1129 = vmul.f32 %v873, %v1065
        %v1130 = vmul.f32 %v874, %v1066
        %v1131 = vmul.f32 %v875, %v1067
        %v1132 = vmul.f32 %v876, %v1068
        %v1133 = vmul.f32 %v877, %v1069
        %v1134 = vmul.f32 %v878, %v1070
        %v1135 = vmul.f32 %v879, %v1071
        %v1136 = vmul.f32 %v880, %v1072
        %v1137 = vmul.f32 %v881, %v1073
        %v1138 = vmul.f32 %v882, %v1074
        %v1139 = vmul.f32 %v883, %v1075
        %v1140 = vmul.f32 %v884, %v1076
        %v1141 = vmul.f32 %v885, %v1077
        %v1142 = vmul.f32 %v886, %v1078
        %v1143 = vmul.f32 %v887, %v1079
        %v1144 = vmul.f32 %v888, %v1080
        %v1145 = vmul.f32 %v889, %v1081
        %v1146 = vmul.f32 %v890, %v1082
        %v1147 = vmul.f32 %v891, %v1083
        %v1148 = vmul.f32 %v443, 0.5
        %v1149 = vmul.f32 %v445, 0.5
        %v1150 = vmul.f32 %v556, 0.5
        %v1151 = vmul.f32 %v558, 0.5
        %v1152 = vmul.f32 %v669, 0.5
        %v1153 = vmul.f32 %v671, 0.5
        %v1154 = vmul.f32 %v782, 0.5
        %v1155 = vmul.f32 %v784, 0.5
        %v1156 = vmul.f32 %v449, 0.5
        %v1157 = vmul.f32 %v451, 0.5
        %v1158 = vmul.f32 %v562, 0.5
        %v1159 = vmul.f32 %v564, 0.5
        %v1160 = vmul.f32 %v675, 0.5
        %v1161 = vmul.f32 %v677, 0.5
        %v1162 = vmul.f32 %v788, 0.5
        %v1163 = vmul.f32 %v790, 0.5
        %v1164 = vmul.f32 %v455, 0.5
        %v1165 = vmul.f32 %v457, 0.5
        %v1166 = vmul.f32 %v568, 0.5
        %v1167 = vmul.f32 %v570, 0.5
        %v1168 = vmul.f32 %v681, 0.5
        %v1169 = vmul.f32 %v683, 0.5
        %v1170 = vmul.f32 %v794, 0.5
        %v1171 = vmul.f32 %v796, 0.5
        %v1172 = vmul.f32 %v461, 0.5
        %v1173 = vmul.f32 %v463, 0.5
        %v1174 = vmul.f32 %v574, 0.5
        %v1175 = vmul.f32 %v576, 0.5
        %v1176 = vmul.f32 %v687, 0.5
        %v1177 = vmul.f32 %v689, 0.5
        %v1178 = vmul.f32 %v800, 0.5
        %v1179 = vmul.f32 %v802, 0.5
        %v1180 = vmul.f32 %v467, 0.5
        %v1181 = vmul.f32 %v469, 0.5
        %v1182 = vmul.f32 %v580, 0.5
        %v1183 = vmul.f32 %v582, 0.5
        %v1184 = vmul.f32 %v693, 0.5
        %v1185 = vmul.f32 %v695, 0.5
        %v1186 = vmul.f32 %v806, 0.5
        %v1187 = vmul.f32 %v808, 0.5
        %v1188 = vmul.f32 %v473, 0.5
        %v1189 = vmul.f32 %v475, 0.5
        %v1190 = vmul.f32 %v586, 0.5
        %v1191 = vmul.f32 %v588, 0.5
        %v1192 = vmul.f32 %v699, 0.5
        %v1193 = vmul.f32 %v701, 0.5
        %v1194 = vmul.f32 %v812, 0.5
        %v1195 = vmul.f32 %v814, 0.5
        %v1196 = vmul.f32 %v479, 0.5
        %v1197 = vmul.f32 %v481, 0.5
        %v1198 = vmul.f32 %v592, 0.5
        %v1199 = vmul.f32 %v594, 0.5
        %v1200 = vmul.f32 %v705, 0.5
        %v1201 = vmul.f32 %v707, 0.5
        %v1202 = vmul.f32 %v818, 0.5
        %v1203 = vmul.f32 %v820, 0.5
        %v1204 = vmul.f32 %v485, 0.5
        %v1205 = vmul.f32 %v487, 0.5
        %v1206 = vmul.f32 %v598, 0.5
        %v1207 = vmul.f32 %v600, 0.5
        %v1208 = vmul.f32 %v711, 0.5
        %v1209 = vmul.f32 %v713, 0.5
        %v1210 = vmul.f32 %v824, 0.5
        %v1211 = vmul.f32 %v826, 0.5
        %v1212 = vtanh.pop %v1084
        %v1213 = vtanh.pop %v1085
        %v1214 = vtanh.pop %v1086
        %v1215 = vtanh.pop %v1087
        %v1216 = vtanh.pop %v1088
        %v1217 = vtanh.pop %v1089
        %v1218 = vtanh.pop %v1090
        %v1219 = vtanh.pop %v1091
        %v1220 = vtanh.pop %v1092
        %v1221 = vtanh.pop %v1093
        %v1222 = vtanh.pop %v1094
        %v1223 = vtanh.pop %v1095
        %v1224 = vtanh.pop %v1096
        %v1225 = vtanh.pop %v1097
        %v1226 = vtanh.pop %v1098
        %v1227 = vtanh.pop %v1099
        %v1228 = vtanh.pop %v1100
        %v1229 = vtanh.pop %v1101
        %v1230 = vtanh.pop %v1102
        %v1231 = vtanh.pop %v1103
        %v1232 = vtanh.pop %v1104
        %v1233 = vtanh.pop %v1105
        %v1234 = vtanh.pop %v1106
        %v1235 = vtanh.pop %v1107
        %v1236 = vtanh.pop %v1108
        %v1237 = vtanh.pop %v1109
        %v1238 = vtanh.pop %v1110
        %v1239 = vtanh.pop %v1111
        %v1240 = vtanh.pop %v1112
        %v1241 = vtanh.pop %v1113
        %v1242 = vtanh.pop %v1114
        %v1243 = vtanh.pop %v1115
        %v1244 = vtanh.pop %v1116
        %v1245 = vtanh.pop %v1117
        %v1246 = vtanh.pop %v1118
        %v1247 = vtanh.pop %v1119
        %v1248 = vtanh.pop %v1120
        %v1249 = vtanh.pop %v1121
        %v1250 = vtanh.pop %v1122
        %v1251 = vtanh.pop %v1123
        %v1252 = vtanh.pop %v1124
        %v1253 = vtanh.pop %v1125
        %v1254 = vtanh.pop %v1126
        %v1255 = vtanh.pop %v1127
        %v1256 = vtanh.pop %v1128
        %v1257 = vtanh.pop %v1129
        %v1258 = vtanh.pop %v1130
        %v1259 = vtanh.pop %v1131
        %v1260 = vtanh.pop %v1132
        %v1261 = vtanh.pop %v1133
        %v1262 = vtanh.pop %v1134
        %v1263 = vtanh.pop %v1135
        %v1264 = vtanh.pop %v1136
        %v1265 = vtanh.pop %v1137
        %v1266 = vtanh.pop %v1138
        %v1267 = vtanh.pop %v1139
        %v1268 = vtanh.pop %v1140
        %v1269 = vtanh.pop %v1141
        %v1270 = vtanh.pop %v1142
        %v1271 = vtanh.pop %v1143
        %v1272 = vtanh.pop %v1144
        %v1273 = vtanh.pop %v1145
        %v1274 = vtanh.pop %v1146
        %v1275 = vtanh.pop %v1147
        %v1276 = vadd.f32 %v1212, 1.0
        %v1277 = vadd.f32 %v1213, 1.0
        %v1278 = vadd.f32 %v1214, 1.0
        %v1279 = vadd.f32 %v1215, 1.0
        %v1280 = vadd.f32 %v1216, 1.0
        %v1281 = vadd.f32 %v1217, 1.0
        %v1282 = vadd.f32 %v1218, 1.0
        %v1283 = vadd.f32 %v1219, 1.0
        %v1284 = vadd.f32 %v1220, 1.0
        %v1285 = vadd.f32 %v1221, 1.0
        %v1286 = vadd.f32 %v1222, 1.0
        %v1287 = vadd.f32 %v1223, 1.0
        %v1288 = vadd.f32 %v1224, 1.0
        %v1289 = vadd.f32 %v1225, 1.0
        %v1290 = vadd.f32 %v1226, 1.0
        %v1291 = vadd.f32 %v1227, 1.0
        %v1292 = vadd.f32 %v1228, 1.0
        %v1293 = vadd.f32 %v1229, 1.0
        %v1294 = vadd.f32 %v1230, 1.0
        %v1295 = vadd.f32 %v1231, 1.0
        %v1296 = vadd.f32 %v1232, 1.0
        %v1297 = vadd.f32 %v1233, 1.0
        %v1298 = vadd.f32 %v1234, 1.0
        %v1299 = vadd.f32 %v1235, 1.0
        %v1300 = vadd.f32 %v1236, 1.0
        %v1301 = vadd.f32 %v1237, 1.0
        %v1302 = vadd.f32 %v1238, 1.0
        %v1303 = vadd.f32 %v1239, 1.0
        %v1304 = vadd.f32 %v1240, 1.0
        %v1305 = vadd.f32 %v1241, 1.0
        %v1306 = vadd.f32 %v1242, 1.0
        %v1307 = vadd.f32 %v1243, 1.0
        %v1308 = vadd.f32 %v1244, 1.0
        %v1309 = vadd.f32 %v1245, 1.0
        %v1310 = vadd.f32 %v1246, 1.0
        %v1311 = vadd.f32 %v1247, 1.0
        %v1312 = vadd.f32 %v1248, 1.0
        %v1313 = vadd.f32 %v1249, 1.0
        %v1314 = vadd.f32 %v1250, 1.0
        %v1315 = vadd.f32 %v1251, 1.0
        %v1316 = vadd.f32 %v1252, 1.0
        %v1317 = vadd.f32 %v1253, 1.0
        %v1318 = vadd.f32 %v1254, 1.0
        %v1319 = vadd.f32 %v1255, 1.0
        %v1320 = vadd.f32 %v1256, 1.0
        %v1321 = vadd.f32 %v1257, 1.0
        %v1322 = vadd.f32 %v1258, 1.0
        %v1323 = vadd.f32 %v1259, 1.0
        %v1324 = vadd.f32 %v1260, 1.0
        %v1325 = vadd.f32 %v1261, 1.0
        %v1326 = vadd.f32 %v1262, 1.0
        %v1327 = vadd.f32 %v1263, 1.0
        %v1328 = vadd.f32 %v1264, 1.0
        %v1329 = vadd.f32 %v1265, 1.0
        %v1330 = vadd.f32 %v1266, 1.0
        %v1331 = vadd.f32 %v1267, 1.0
        %v1332 = vadd.f32 %v1268, 1.0
        %v1333 = vadd.f32 %v1269, 1.0
        %v1334 = vadd.f32 %v1270, 1.0
        %v1335 = vadd.f32 %v1271, 1.0
        %v1336 = vadd.f32 %v1272, 1.0
        %v1337 = vadd.f32 %v1273, 1.0
        %v1338 = vadd.f32 %v1274, 1.0
        %v1339 = vadd.f32 %v1275, 1.0
        %v1340 = vmul.f32 %v1148, %v1276
        %v1341 = vmul.f32 %v1149, %v1277
        %v1342 = vmul.f32 %v1150, %v1278
        %v1343 = vmul.f32 %v1151, %v1279
        %v1344 = vmul.f32 %v1152, %v1280
        %v1345 = vmul.f32 %v1153, %v1281
        %v1346 = vmul.f32 %v1154, %v1282
        %v1347 = vmul.f32 %v1155, %v1283
        %v1348 = vmul.f32 %v1156, %v1284
        %v1349 = vmul.f32 %v1157, %v1285
        %v1350 = vmul.f32 %v1158, %v1286
        %v1351 = vmul.f32 %v1159, %v1287
        %v1352 = vmul.f32 %v1160, %v1288
        %v1353 = vmul.f32 %v1161, %v1289
        %v1354 = vmul.f32 %v1162, %v1290
        %v1355 = vmul.f32 %v1163, %v1291
        %v1356 = vmul.f32 %v1164, %v1292
        %v1357 = vmul.f32 %v1165, %v1293
        %v1358 = vmul.f32 %v1166, %v1294
        %v1359 = vmul.f32 %v1167, %v1295
        %v1360 = vmul.f32 %v1168, %v1296
        %v1361 = vmul.f32 %v1169, %v1297
        %v1362 = vmul.f32 %v1170, %v1298
        %v1363 = vmul.f32 %v1171, %v1299
        %v1364 = vmul.f32 %v1172, %v1300
        %v1365 = vmul.f32 %v1173, %v1301
        %v1366 = vmul.f32 %v1174, %v1302
        %v1367 = vmul.f32 %v1175, %v1303
        %v1368 = vmul.f32 %v1176, %v1304
        %v1369 = vmul.f32 %v1177, %v1305
        %v1370 = vmul.f32 %v1178, %v1306
        %v1371 = vmul.f32 %v1179, %v1307
        %v1372 = vmul.f32 %v1180, %v1308
        %v1373 = vmul.f32 %v1181, %v1309
        %v1374 = vmul.f32 %v1182, %v1310
        %v1375 = vmul.f32 %v1183, %v1311
        %v1376 = vmul.f32 %v1184, %v1312
        %v1377 = vmul.f32 %v1185, %v1313
        %v1378 = vmul.f32 %v1186, %v1314
        %v1379 = vmul.f32 %v1187, %v1315
        %v1380 = vmul.f32 %v1188, %v1316
        %v1381 = vmul.f32 %v1189, %v1317
        %v1382 = vmul.f32 %v1190, %v1318
        %v1383 = vmul.f32 %v1191, %v1319
        %v1384 = vmul.f32 %v1192, %v1320
        %v1385 = vmul.f32 %v1193, %v1321
        %v1386 = vmul.f32 %v1194, %v1322
        %v1387 = vmul.f32 %v1195, %v1323
        %v1388 = vmul.f32 %v1196, %v1324
        %v1389 = vmul.f32 %v1197, %v1325
        %v1390 = vmul.f32 %v1198, %v1326
        %v1391 = vmul.f32 %v1199, %v1327
        %v1392 = vmul.f32 %v1200, %v1328
        %v1393 = vmul.f32 %v1201, %v1329
        %v1394 = vmul.f32 %v1202, %v1330
        %v1395 = vmul.f32 %v1203, %v1331
        %v1396 = vmul.f32 %v1204, %v1332
        %v1397 = vmul.f32 %v1205, %v1333
        %v1398 = vmul.f32 %v1206, %v1334
        %v1399 = vmul.f32 %v1207, %v1335
        %v1400 = vmul.f32 %v1208, %v1336
        %v1401 = vmul.f32 %v1209, %v1337
        %v1402 = vmul.f32 %v1210, %v1338
        %v1403 = vmul.f32 %v1211, %v1339
        %v1404 = vld [vmem:[%s3] sm:$0xff]
        %v1405 = vld [vmem:[%s3 + $0x8] sm:$0xff]
        %v1406 = vld [vmem:[%s3 + $0x10] sm:$0xff]
        %v1407 = vld [vmem:[%s3 + $0x18] sm:$0xff]
        %v1408 = vld [vmem:[%s4] sm:$0xff]
        %v1409 = vld [vmem:[%s4 + $0x8] sm:$0xff]
        %v1410 = vld [vmem:[%s4 + $0x10] sm:$0xff]
        %v1411 = vld [vmem:[%s4 + $0x18] sm:$0xff]
        %1413 = vset.pattern.permute.xlu0 0
        %1414 = vperm.xlu0 %1413, %v1408
        %v1415 = vpop.permute.xlu0 %1414
        %1418 = vset.pattern.permute.xlu0 0
        %1419 = vperm.xlu0 %1418, %v1409
        %v1420 = vpop.permute.xlu0 %1419
        %1423 = vset.pattern.permute.xlu0 0
        %1424 = vperm.xlu0 %1423, %v1410
        %v1425 = vpop.permute.xlu0 %1424
        %1428 = vset.pattern.permute.xlu0 0
        %1429 = vperm.xlu0 %1428, %v1411
        %v1430 = vpop.permute.xlu0 %1429
        %vm1432 = vcmask 523264
        %v1434 = vsel %vm1432, %v1404, 0
        %v1437 = vsel %vm1432, %v1405, 0
        %v1440 = vsel %vm1432, %v1406, 0
        %v1443 = vsel %vm1432, %v1407, 0
        %1445 = vmatprep.subr.mxu0 %v1341
        %1446 = vmatpush1.msra.mxu0 %v1340
        %1447 = vmatprep.subr.mxu0 %v1349
        %1448 = vmatpush1.msra.mxu0 %v1348
        %1449 = vmatprep.subr.mxu0 %v1357
        %1450 = vmatpush1.msra.mxu0 %v1356
        %1451 = vmatprep.subr.mxu0 %v1365
        %1452 = vmatpush1.msra.mxu0 %v1364
        %1453 = vmatprep.subr.mxu0 %v1373
        %1454 = vmatpush1.msra.mxu0 %v1372
        %1455 = vmatprep.subr.mxu0 %v1381
        %1456 = vmatpush1.msra.mxu0 %v1380
        %1457 = vmatprep.subr.mxu0 %v1389
        %1458 = vmatpush1.msra.mxu0 %v1388
        %1459 = vmatprep.subr.mxu0 %v1397
        %1460 = vmatpush1.msra.mxu0 %v1396
        %1461 = vmatprep.subr.mxu0 0.0
        %1462 = vmatpush1.msra.mxu0 0.0
        %1463 = vmatprep.subr.mxu0 0.0
        %1464 = vmatpush1.msra.mxu0 0.0
        %1465 = vmatprep.subr.mxu0 0.0
        %1466 = vmatpush1.msra.mxu0 0.0
        %1467 = vmatprep.subr.mxu0 0.0
        %1468 = vmatpush1.msra.mxu0 0.0
        %1469 = vmatprep.subr.mxu0 0.0
        %1470 = vmatpush1.msra.mxu0 0.0
        %1471 = vmatprep.subr.mxu0 0.0
        %1472 = vmatpush1.msra.mxu0 0.0
        %1473 = vmatprep.subr.mxu0 0.0
        %1474 = vmatpush1.msra.mxu0 0.0
        %1475 = vmatprep.subr.mxu0 0.0
        %1476 = vmatpush1.msra.mxu0 0.0
        %1477 = vmatprep.subr.mxu0 0.0
        %1478 = vmatpush1.msra.mxu0 0.0
        %1479 = vmatprep.subr.mxu0 0.0
        %1480 = vmatpush1.msra.mxu0 0.0
        %1481 = vmatprep.subr.mxu0 0.0
        %1482 = vmatpush1.msra.mxu0 0.0
        %1483 = vmatprep.subr.mxu0 0.0
        %1484 = vmatpush1.msra.mxu0 0.0
        %1485 = vmatprep.subr.mxu0 0.0
        %1486 = vmatpush1.msra.mxu0 0.0
        %1487 = vmatprep.subr.mxu0 0.0
        %1488 = vmatpush1.msra.mxu0 0.0
        %1489 = vmatprep.subr.mxu0 0.0
        %1490 = vmatpush1.msra.mxu0 0.0
        %1491 = vmatprep.subr.mxu0 0.0
        %1492 = vmatpush1.msra.mxu0 0.0
        %1493 = vmatprep.subr.mxu0 0.0
        %1494 = vmatpush1.msra.mxu0 0.0
        %1495 = vmatprep.subr.mxu0 0.0
        %1496 = vmatpush1.msra.mxu0 0.0
        %1497 = vmatprep.subr.mxu0 0.0
        %1498 = vmatpush1.msra.mxu0 0.0
        %1499 = vmatprep.subr.mxu0 0.0
        %1500 = vmatpush1.msra.mxu0 0.0
        %1501 = vmatprep.subr.mxu0 0.0
        %1502 = vmatpush1.msra.mxu0 0.0
        %1503 = vmatprep.subr.mxu0 0.0
        %1504 = vmatpush1.msra.mxu0 0.0
        %1505 = vmatprep.subr.mxu0 0.0
        %1506 = vmatpush1.msra.mxu0 0.0
        %1507 = vmatprep.subr.mxu0 0.0
        %1508 = vmatpush1.msra.mxu0 0.0
        %1509 = vmatprep.mubr.f32.mxu0 0.0
        %1510 = vmatmul.mubr.f32.gmra.mrb[0].mxu0 %v1434
        %v1511 = vpop.f32.mrb[0].mxu0
        %v1512 = vadd.f32 %v1415, %v1511
        %v1513 = vpop.f32.mrb[0].mxu0
        %v1514 = vadd.f32 %v1415, %v1513
        %1515 = vmatprep.mubr.f32.mxu0 0.0
        %1516 = vmatmul.mubr.f32.gmra.mrb[0].mxu0 %v1437
        %v1517 = vpop.f32.mrb[0].mxu0
        %v1518 = vadd.f32 %v1420, %v1517
        %v1519 = vpop.f32.mrb[0].mxu0
        %v1520 = vadd.f32 %v1420, %v1519
        %1521 = vmatprep.mubr.f32.mxu0 0.0
        %1522 = vmatmul.mubr.f32.gmra.mrb[0].mxu0 %v1440
        %v1523 = vpop.f32.mrb[0].mxu0
        %v1524 = vadd.f32 %v1425, %v1523
        %v1525 = vpop.f32.mrb[0].mxu0
        %v1526 = vadd.f32 %v1425, %v1525
        %1527 = vmatprep.mubr.f32.mxu0 0.0
        %1528 = vmatmul.mubr.f32.gmra.mrb[0].mxu0 %v1443
        %v1529 = vpop.f32.mrb[0].mxu0
        %v1530 = vadd.f32 %v1430, %v1529
        %v1531 = vpop.f32.mrb[0].mxu0
        %v1532 = vadd.f32 %v1430, %v1531
        %1533 = vdwg.mxu0
        %1534 = vmatprep.subr.mxu0 %v1343
        %1535 = vmatpush1.msra.mxu0 %v1342
        %1536 = vmatprep.subr.mxu0 %v1351
        %1537 = vmatpush1.msra.mxu0 %v1350
        %1538 = vmatprep.subr.mxu0 %v1359
        %1539 = vmatpush1.msra.mxu0 %v1358
        %1540 = vmatprep.subr.mxu0 %v1367
        %1541 = vmatpush1.msra.mxu0 %v1366
        %1542 = vmatprep.subr.mxu0 %v1375
        %1543 = vmatpush1.msra.mxu0 %v1374
        %1544 = vmatprep.subr.mxu0 %v1383
        %1545 = vmatpush1.msra.mxu0 %v1382
        %1546 = vmatprep.subr.mxu0 %v1391
        %1547 = vmatpush1.msra.mxu0 %v1390
        %1548 = vmatprep.subr.mxu0 %v1399
        %1549 = vmatpush1.msra.mxu0 %v1398
        %1550 = vmatprep.subr.mxu0 0.0
        %1551 = vmatpush1.msra.mxu0 0.0
        %1552 = vmatprep.subr.mxu0 0.0
        %1553 = vmatpush1.msra.mxu0 0.0
        %1554 = vmatprep.subr.mxu0 0.0
        %1555 = vmatpush1.msra.mxu0 0.0
        %1556 = vmatprep.subr.mxu0 0.0
        %1557 = vmatpush1.msra.mxu0 0.0
        %1558 = vmatprep.subr.mxu0 0.0
        %1559 = vmatpush1.msra.mxu0 0.0
        %1560 = vmatprep.subr.mxu0 0.0
        %1561 = vmatpush1.msra.mxu0 0.0
        %1562 = vmatprep.subr.mxu0 0.0
        %1563 = vmatpush1.msra.mxu0 0.0
        %1564 = vmatprep.subr.mxu0 0.0
        %1565 = vmatpush1.msra.mxu0 0.0
        %1566 = vmatprep.subr.mxu0 0.0
        %1567 = vmatpush1.msra.mxu0 0.0
        %1568 = vmatprep.subr.mxu0 0.0
        %1569 = vmatpush1.msra.mxu0 0.0
        %1570 = vmatprep.subr.mxu0 0.0
        %1571 = vmatpush1.msra.mxu0 0.0
        %1572 = vmatprep.subr.mxu0 0.0
        %1573 = vmatpush1.msra.mxu0 0.0
        %1574 = vmatprep.subr.mxu0 0.0
        %1575 = vmatpush1.msra.mxu0 0.0
        %1576 = vmatprep.subr.mxu0 0.0
        %1577 = vmatpush1.msra.mxu0 0.0
        %1578 = vmatprep.subr.mxu0 0.0
        %1579 = vmatpush1.msra.mxu0 0.0
        %1580 = vmatprep.subr.mxu0 0.0
        %1581 = vmatpush1.msra.mxu0 0.0
        %1582 = vmatprep.subr.mxu0 0.0
        %1583 = vmatpush1.msra.mxu0 0.0
        %1584 = vmatprep.subr.mxu0 0.0
        %1585 = vmatpush1.msra.mxu0 0.0
        %1586 = vmatprep.subr.mxu0 0.0
        %1587 = vmatpush1.msra.mxu0 0.0
        %1588 = vmatprep.subr.mxu0 0.0
        %1589 = vmatpush1.msra.mxu0 0.0
        %1590 = vmatprep.subr.mxu0 0.0
        %1591 = vmatpush1.msra.mxu0 0.0
        %1592 = vmatprep.subr.mxu0 0.0
        %1593 = vmatpush1.msra.mxu0 0.0
        %1594 = vmatprep.subr.mxu0 0.0
        %1595 = vmatpush1.msra.mxu0 0.0
        %1596 = vmatprep.subr.mxu0 0.0
        %1597 = vmatpush1.msra.mxu0 0.0
        %1598 = vmatprep.mubr.f32.mxu0 0.0
        %1599 = vmatmul.mubr.f32.gmra.mrb[0].mxu0 %v1434
        %v1600 = vpop.f32.mrb[0].mxu0
        %v1601 = vadd.f32 %v1415, %v1600
        %v1602 = vpop.f32.mrb[0].mxu0
        %v1603 = vadd.f32 %v1415, %v1602
        %1604 = vmatprep.mubr.f32.mxu0 0.0
        %1605 = vmatmul.mubr.f32.gmra.mrb[0].mxu0 %v1437
        %v1606 = vpop.f32.mrb[0].mxu0
        %v1607 = vadd.f32 %v1420, %v1606
        %v1608 = vpop.f32.mrb[0].mxu0
        %v1609 = vadd.f32 %v1420, %v1608
        %1610 = vmatprep.mubr.f32.mxu0 0.0
        %1611 = vmatmul.mubr.f32.gmra.mrb[0].mxu0 %v1440
        %v1612 = vpop.f32.mrb[0].mxu0
        %v1613 = vadd.f32 %v1425, %v1612
        %v1614 = vpop.f32.mrb[0].mxu0
        %v1615 = vadd.f32 %v1425, %v1614
        %1616 = vmatprep.mubr.f32.mxu0 0.0
        %1617 = vmatmul.mubr.f32.gmra.mrb[0].mxu0 %v1443
        %v1618 = vpop.f32.mrb[0].mxu0
        %v1619 = vadd.f32 %v1430, %v1618
        %v1620 = vpop.f32.mrb[0].mxu0
        %v1621 = vadd.f32 %v1430, %v1620
        %1622 = vdwg.mxu0
        %1623 = vmatprep.subr.mxu0 %v1345
        %1624 = vmatpush1.msra.mxu0 %v1344
        %1625 = vmatprep.subr.mxu0 %v1353
        %1626 = vmatpush1.msra.mxu0 %v1352
        %1627 = vmatprep.subr.mxu0 %v1361
        %1628 = vmatpush1.msra.mxu0 %v1360
        %1629 = vmatprep.subr.mxu0 %v1369
        %1630 = vmatpush1.msra.mxu0 %v1368
        %1631 = vmatprep.subr.mxu0 %v1377
        %1632 = vmatpush1.msra.mxu0 %v1376
        %1633 = vmatprep.subr.mxu0 %v1385
        %1634 = vmatpush1.msra.mxu0 %v1384
        %1635 = vmatprep.subr.mxu0 %v1393
        %1636 = vmatpush1.msra.mxu0 %v1392
        %1637 = vmatprep.subr.mxu0 %v1401
        %1638 = vmatpush1.msra.mxu0 %v1400
        %1639 = vmatprep.subr.mxu0 0.0
        %1640 = vmatpush1.msra.mxu0 0.0
        %1641 = vmatprep.subr.mxu0 0.0
        %1642 = vmatpush1.msra.mxu0 0.0
        %1643 = vmatprep.subr.mxu0 0.0
        %1644 = vmatpush1.msra.mxu0 0.0
        %1645 = vmatprep.subr.mxu0 0.0
        %1646 = vmatpush1.msra.mxu0 0.0
        %1647 = vmatprep.subr.mxu0 0.0
        %1648 = vmatpush1.msra.mxu0 0.0
        %1649 = vmatprep.subr.mxu0 0.0
        %1650 = vmatpush1.msra.mxu0 0.0
        %1651 = vmatprep.subr.mxu0 0.0
        %1652 = vmatpush1.msra.mxu0 0.0
        %1653 = vmatprep.subr.mxu0 0.0
        %1654 = vmatpush1.msra.mxu0 0.0
        %1655 = vmatprep.subr.mxu0 0.0
        %1656 = vmatpush1.msra.mxu0 0.0
        %1657 = vmatprep.subr.mxu0 0.0
        %1658 = vmatpush1.msra.mxu0 0.0
        %1659 = vmatprep.subr.mxu0 0.0
        %1660 = vmatpush1.msra.mxu0 0.0
        %1661 = vmatprep.subr.mxu0 0.0
        %1662 = vmatpush1.msra.mxu0 0.0
        %1663 = vmatprep.subr.mxu0 0.0
        %1664 = vmatpush1.msra.mxu0 0.0
        %1665 = vmatprep.subr.mxu0 0.0
        %1666 = vmatpush1.msra.mxu0 0.0
        %1667 = vmatprep.subr.mxu0 0.0
        %1668 = vmatpush1.msra.mxu0 0.0
        %1669 = vmatprep.subr.mxu0 0.0
        %1670 = vmatpush1.msra.mxu0 0.0
        %1671 = vmatprep.subr.mxu0 0.0
        %1672 = vmatpush1.msra.mxu0 0.0
        %1673 = vmatprep.subr.mxu0 0.0
        %1674 = vmatpush1.msra.mxu0 0.0
        %1675 = vmatprep.subr.mxu0 0.0
        %1676 = vmatpush1.msra.mxu0 0.0
        %1677 = vmatprep.subr.mxu0 0.0
        %1678 = vmatpush1.msra.mxu0 0.0
        %1679 = vmatprep.subr.mxu0 0.0
        %1680 = vmatpush1.msra.mxu0 0.0
        %1681 = vmatprep.subr.mxu0 0.0
        %1682 = vmatpush1.msra.mxu0 0.0
        %1683 = vmatprep.subr.mxu0 0.0
        %1684 = vmatpush1.msra.mxu0 0.0
        %1685 = vmatprep.subr.mxu0 0.0
        %1686 = vmatpush1.msra.mxu0 0.0
        %1687 = vmatprep.mubr.f32.mxu0 0.0
        %1688 = vmatmul.mubr.f32.gmra.mrb[0].mxu0 %v1434
        %v1689 = vpop.f32.mrb[0].mxu0
        %v1690 = vadd.f32 %v1415, %v1689
        %v1691 = vpop.f32.mrb[0].mxu0
        %v1692 = vadd.f32 %v1415, %v1691
        %1693 = vmatprep.mubr.f32.mxu0 0.0
        %1694 = vmatmul.mubr.f32.gmra.mrb[0].mxu0 %v1437
        %v1695 = vpop.f32.mrb[0].mxu0
        %v1696 = vadd.f32 %v1420, %v1695
        %v1697 = vpop.f32.mrb[0].mxu0
        %v1698 = vadd.f32 %v1420, %v1697
        %1699 = vmatprep.mubr.f32.mxu0 0.0
        %1700 = vmatmul.mubr.f32.gmra.mrb[0].mxu0 %v1440
        %v1701 = vpop.f32.mrb[0].mxu0
        %v1702 = vadd.f32 %v1425, %v1701
        %v1703 = vpop.f32.mrb[0].mxu0
        %v1704 = vadd.f32 %v1425, %v1703
        %1705 = vmatprep.mubr.f32.mxu0 0.0
        %1706 = vmatmul.mubr.f32.gmra.mrb[0].mxu0 %v1443
        %v1707 = vpop.f32.mrb[0].mxu0
        %v1708 = vadd.f32 %v1430, %v1707
        %v1709 = vpop.f32.mrb[0].mxu0
        %v1710 = vadd.f32 %v1430, %v1709
        %1711 = vdwg.mxu0
        %1712 = vmatprep.subr.mxu0 %v1347
        %1713 = vmatpush1.msra.mxu0 %v1346
        %1714 = vmatprep.subr.mxu0 %v1355
        %1715 = vmatpush1.msra.mxu0 %v1354
        %1716 = vmatprep.subr.mxu0 %v1363
        %1717 = vmatpush1.msra.mxu0 %v1362
        %1718 = vmatprep.subr.mxu0 %v1371
        %1719 = vmatpush1.msra.mxu0 %v1370
        %1720 = vmatprep.subr.mxu0 %v1379
        %1721 = vmatpush1.msra.mxu0 %v1378
        %1722 = vmatprep.subr.mxu0 %v1387
        %1723 = vmatpush1.msra.mxu0 %v1386
        %1724 = vmatprep.subr.mxu0 %v1395
        %1725 = vmatpush1.msra.mxu0 %v1394
        %1726 = vmatprep.subr.mxu0 %v1403
        %1727 = vmatpush1.msra.mxu0 %v1402
        %1728 = vmatprep.subr.mxu0 0.0
        %1729 = vmatpush1.msra.mxu0 0.0
        %1730 = vmatprep.subr.mxu0 0.0
        %1731 = vmatpush1.msra.mxu0 0.0
        %1732 = vmatprep.subr.mxu0 0.0
        %1733 = vmatpush1.msra.mxu0 0.0
        %1734 = vmatprep.subr.mxu0 0.0
        %1735 = vmatpush1.msra.mxu0 0.0
        %1736 = vmatprep.subr.mxu0 0.0
        %1737 = vmatpush1.msra.mxu0 0.0
        %1738 = vmatprep.subr.mxu0 0.0
        %1739 = vmatpush1.msra.mxu0 0.0
        %1740 = vmatprep.subr.mxu0 0.0
        %1741 = vmatpush1.msra.mxu0 0.0
        %1742 = vmatprep.subr.mxu0 0.0
        %1743 = vmatpush1.msra.mxu0 0.0
        %1744 = vmatprep.subr.mxu0 0.0
        %1745 = vmatpush1.msra.mxu0 0.0
        %1746 = vmatprep.subr.mxu0 0.0
        %1747 = vmatpush1.msra.mxu0 0.0
        %1748 = vmatprep.subr.mxu0 0.0
        %1749 = vmatpush1.msra.mxu0 0.0
        %1750 = vmatprep.subr.mxu0 0.0
        %1751 = vmatpush1.msra.mxu0 0.0
        %1752 = vmatprep.subr.mxu0 0.0
        %1753 = vmatpush1.msra.mxu0 0.0
        %1754 = vmatprep.subr.mxu0 0.0
        %1755 = vmatpush1.msra.mxu0 0.0
        %1756 = vmatprep.subr.mxu0 0.0
        %1757 = vmatpush1.msra.mxu0 0.0
        %1758 = vmatprep.subr.mxu0 0.0
        %1759 = vmatpush1.msra.mxu0 0.0
        %1760 = vmatprep.subr.mxu0 0.0
        %1761 = vmatpush1.msra.mxu0 0.0
        %1762 = vmatprep.subr.mxu0 0.0
        %1763 = vmatpush1.msra.mxu0 0.0
        %1764 = vmatprep.subr.mxu0 0.0
        %1765 = vmatpush1.msra.mxu0 0.0
        %1766 = vmatprep.subr.mxu0 0.0
        %1767 = vmatpush1.msra.mxu0 0.0
        %1768 = vmatprep.subr.mxu0 0.0
        %1769 = vmatpush1.msra.mxu0 0.0
        %1770 = vmatprep.subr.mxu0 0.0
        %1771 = vmatpush1.msra.mxu0 0.0
        %1772 = vmatprep.subr.mxu0 0.0
        %1773 = vmatpush1.msra.mxu0 0.0
        %1774 = vmatprep.subr.mxu0 0.0
        %1775 = vmatpush1.msra.mxu0 0.0
        %1776 = vmatprep.mubr.f32.mxu0 0.0
        %1777 = vmatmul.mubr.f32.gmra.mrb[0].mxu0 %v1434
        %v1778 = vpop.f32.mrb[0].mxu0
        %v1779 = vadd.f32 %v1415, %v1778
        %v1780 = vpop.f32.mrb[0].mxu0
        %v1781 = vadd.f32 %v1415, %v1780
        %1782 = vmatprep.mubr.f32.mxu0 0.0
        %1783 = vmatmul.mubr.f32.gmra.mrb[0].mxu0 %v1437
        %v1784 = vpop.f32.mrb[0].mxu0
        %v1785 = vadd.f32 %v1420, %v1784
        %v1786 = vpop.f32.mrb[0].mxu0
        %v1787 = vadd.f32 %v1420, %v1786
        %1788 = vmatprep.mubr.f32.mxu0 0.0
        %1789 = vmatmul.mubr.f32.gmra.mrb[0].mxu0 %v1440
        %v1790 = vpop.f32.mrb[0].mxu0
        %v1791 = vadd.f32 %v1425, %v1790
        %v1792 = vpop.f32.mrb[0].mxu0
        %v1793 = vadd.f32 %v1425, %v1792
        %1794 = vmatprep.mubr.f32.mxu0 0.0
        %1795 = vmatmul.mubr.f32.gmra.mrb[0].mxu0 %v1443
        %v1796 = vpop.f32.mrb[0].mxu0
        %v1797 = vadd.f32 %v1430, %v1796
        %v1798 = vpop.f32.mrb[0].mxu0
        %v1799 = vadd.f32 %v1430, %v1798
        %1800 = vdwg.mxu0
        %1801 = vst [vmem:[%s260] sm:$0xff] %v1512
        %1802 = vst [vmem:[%s260 + $0x8] sm:$0xff] %v1514
        %1803 = vst [vmem:[%s260 + $0x10] sm:$0xff] %v1601
        %1804 = vst [vmem:[%s260 + $0x18] sm:$0xff] %v1603
        %1805 = vst [vmem:[%s260 + $0x20] sm:$0xff] %v1690
        %1806 = vst [vmem:[%s260 + $0x28] sm:$0xff] %v1692
        %1807 = vst [vmem:[%s260 + $0x30] sm:$0xff] %v1779
        %1808 = vst [vmem:[%s260 + $0x38] sm:$0xff] %v1781
        %1809 = vst [vmem:[%s260 + $0x40] sm:$0xff] %v1518
        %1810 = vst [vmem:[%s260 + $0x48] sm:$0xff] %v1520
        %1811 = vst [vmem:[%s260 + $0x50] sm:$0xff] %v1607
        %1812 = vst [vmem:[%s260 + $0x58] sm:$0xff] %v1609
        %1813 = vst [vmem:[%s260 + $0x60] sm:$0xff] %v1696
        %1814 = vst [vmem:[%s260 + $0x68] sm:$0xff] %v1698
        %1815 = vst [vmem:[%s260 + $0x70] sm:$0xff] %v1785
        %1816 = vst [vmem:[%s260 + $0x78] sm:$0xff] %v1787
        %1817 = vst [vmem:[%s260 + $0x80] sm:$0xff] %v1524
        %1818 = vst [vmem:[%s260 + $0x88] sm:$0xff] %v1526
        %1819 = vst [vmem:[%s260 + $0x90] sm:$0xff] %v1613
        %1820 = vst [vmem:[%s260 + $0x98] sm:$0xff] %v1615
        %1821 = vst [vmem:[%s260 + $0xa0] sm:$0xff] %v1702
        %1822 = vst [vmem:[%s260 + $0xa8] sm:$0xff] %v1704
        %1823 = vst [vmem:[%s260 + $0xb0] sm:$0xff] %v1791
        %1824 = vst [vmem:[%s260 + $0xb8] sm:$0xff] %v1793
        %1825 = vst [vmem:[%s260 + $0xc0] sm:$0xff] %v1530
        %1826 = vst [vmem:[%s260 + $0xc8] sm:$0xff] %v1532
        %1827 = vst [vmem:[%s260 + $0xd0] sm:$0xff] %v1619
        %1828 = vst [vmem:[%s260 + $0xd8] sm:$0xff] %v1621
        %1829 = vst [vmem:[%s260 + $0xe0] sm:$0xff] %v1708
        %1830 = vst [vmem:[%s260 + $0xe8] sm:$0xff] %v1710
        %1831 = vst [vmem:[%s260 + $0xf0] sm:$0xff] %v1797
        %1832 = vst [vmem:[%s260 + $0xf8] sm:$0xff] %v1799
        %s1833 = sand.u32 %s156, 1
        %s1834 = scalar_lea.sflag [#allocation4], %s1833
        %s1835 = sand.u32 %s156, 1
        %s1836 = smul.addr %s1835, 256
        %s1837 = scalar_lea.vmem [#allocation5], %s1836
        // Predicated region
        $region45: #{tpu_custom_call.1} parent=39 // pred_check
          %p1838 = pneg %p166
        $region46: #{tpu_custom_call.1} parent=39 // pred_check_branch
          %1840 = sbr.rel (%p1838) target = $region48
        $region47: #{tpu_custom_call.1} parent=39 // pred_region
          %s1841 = smul.u32 8, %s27
          %s1843 = ssub.s32 4096, 4096
          %1844 = vsyncadd %s1834, %s1843
          %s1845 = smul.addr %s26, 32
          %s1846 = sadd.s32 %s1841, %s1845
          %s1847 = smul.addr %s1846, 128
          %s1848 = scalar_lea.hbm %s5, %s1847
          %s1849 = sshll.u32 %s1837, 4
          %s1850 = int_to_ptr.vmem [resolvable:$true] %s1849
          %1855 = dma.vmem_to_hbm [thread:$0]  %s1850, 4096, %s1848, %s1834, 1024, 1024, 64
        $region48: #{tpu_custom_call.1} parent=39 // pred_fallthru
          _
      $region40: #{tpu_custom_call.1} parent=5 // pred_fallthru
        _
      %p1856 = scmp.le.s32.totalorder 2, %s17
      // Predicated region
      $region49: #{tpu_custom_call.1} parent=5 // pred_check
        %p1857 = pneg %p1856
      $region50: #{tpu_custom_call.1} parent=5 // pred_check_branch
        %1859 = sbr.rel (%p1857) target = $region52
      $region51: #{tpu_custom_call.1} parent=5 // pred_region
        %s1860 = ssub.s32 %s17, 2
        // Predicated region
        $region53: #{tpu_custom_call.1} parent=51 // pred_check
          %p1861 = pneg %p172
        $region54: #{tpu_custom_call.1} parent=51 // pred_check_branch
          %1863 = sbr.rel (%p1861) target = $region56
        $region55: #{tpu_custom_call.1} parent=51 // pred_region
          %s1864 = sand.u32 %s157, 1
          %s1865 = scalar_lea.sflag [#allocation4], %s1864
          %s1866 = sand.u32 %s157, 1
          %s1867 = smul.addr %s1866, 256
          %s1868 = scalar_lea.vmem [#allocation5], %s1867
          %1869 = dma.done %s1865, 4096
        $region56: #{tpu_custom_call.1} parent=51 // pred_fallthru
          _
      $region52: #{tpu_custom_call.1} parent=5 // pred_fallthru
        _
    $region6: #{tpu_custom_call.1} parent=1 // loop_footer
      %s21 = sadd.s32 1, %s17
    $region7: #{tpu_custom_call.1} parent=1 // loop_footer_branch
      %16 = sbr.rel target = $region3
    $region8: #{tpu_custom_call.1} parent=1 // loop_exit
      _
    %1870 = vsyncpa [#allocation3], 1
    %s1871 = scalar_lea.sflag [#allocation3], 1
    %1872 = vsyncpa %s1871, 1
    %1873 = vsyncpa [#allocation4], 1
    %s1874 = scalar_lea.sflag [#allocation4], 1
    %1875 = vsyncpa %s1874, 1

</llo_original>
